<compile_context>
chip_gen: v7x
topology: tpu7x:2x2x1
jax: 0.10.0
libtpu: 0.0.40
codegen_flags: <defaults>
</compile_context>

<pallas_src>
import functools

import jax
import jax.numpy as jnp
from jax import lax
from jax.experimental import pallas as pl
from jax.experimental.pallas import tpu as pltpu


def _tensorcores_per_chip():
    """v7x exposes 2 TensorCores per chip; v5e/v6e have 1. Fallback: 1."""
    try:
        kind = jax.devices()[0].device_kind.lower()
    except Exception:
        return 1
    return 2 if "v7" in kind else 1


def _fused_model_kernel(x_ref, w1a_ref, w1b_ref, w2a_ref, w2b_ref,
                        b1_ref, b2_ref, o_ref, xcol_ref, *, H, W, C):
    HW = H * W
    L = x_ref.shape[-1]               # lane extent of this block (HW or N*HW)

    x0 = x_ref[...]                   # (C, L) f32, lane-dense
    b1 = b1_ref[...]                  # (C, 1)  bias1 + x3 (pre-folded)
    b2 = b2_ref[...]                  # (C, 1)  bias2 + x3
    w1a = w1a_ref[...]                # (C, 8C) im2col weight, taps 0..7, layers 1&2
    w1b = w1b_ref[...]                # (C,  C) im2col weight, tap 8,     layers 1&2
    w2a = w2a_ref[...]                # (C, 8C) layer 3
    w2b = w2b_ref[...]                # (C,  C) layer 3

    # Per-image local position / column index.  HW and W are powers of two, so
    # the modulo is a bitmask; blocks always start on an image boundary, so the
    # same math is valid whether the block holds one image or the whole batch.
    pos = lax.broadcasted_iota(jnp.int32, (C, L), 1)
    lp = jnp.bitwise_and(pos, HW - 1)         # position within its image
    col = jnp.bitwise_and(pos, W - 1)         # column within its row

    # Four primitive 'same'-padding validity conditions (kept live across all
    # three convs; the per-tap AND is done lazily to bound mask live ranges).
    has_up = lp >= W                          # a row above exists
    has_down = lp < HW - W                    # a row below exists
    has_left = col >= 1                       # a column to the left exists
    has_right = col < W - 1                   # a column to the right exists

    offsets = [(oh, ow) for oh in (-1, 0, 1) for ow in (-1, 0, 1)]

    def tap(xin, k):
        """Tap k of the 3x3 stencil: lane-roll + zero out 'same'-padding lanes."""
        oh, ow = offsets[k]
        d = oh * W + ow                       # flat-index delta of this tap
        s = xin if d == 0 else pltpu.roll(xin, shift=(-d) % L, axis=1)
        m = None
        for cond, use in ((has_up, oh == -1), (has_down, oh == 1),
                          (has_left, ow == -1), (has_right, ow == 1)):
            if use:
                m = cond if m is None else (m & cond)
        if m is not None:
            s = jnp.where(m, s, 0.0)
        return s

    def conv(xin, wa, wb, bias):
        # im2col slabs for taps 0..7 -> (8C, L) VMEM scratch, one K=128 matmul.
        for k in range(8):
            xcol_ref[pl.ds(k * C, C), :] = tap(xin, k)
        acc = jnp.dot(wa, xcol_ref[...], preferred_element_type=jnp.float32)
        # Tap 8 stays in registers; its K=16 matmul is accumulated afterwards so
        # the full-depth MXU pass can overlap the 9th tap's roll/select.
        acc = acc + jnp.dot(wb, tap(xin, 8), preferred_element_type=jnp.float32)
        return acc + bias                     # (C, L) + (C, 1) lane-broadcast

    v3 = jnp.tanh(conv(x0, w1a, w1b, b1))
    v6 = jnp.tanh(conv(v3, w1a, w1b, b1))
    v9 = jnp.maximum(conv(v6, w2a, w2b, b2), 0.0)
    o_ref[...] = v9


def model_forward(x_nchw, x3, params, *, grid_steps=None):
    N, C, H, W = x_nchw.shape
    HW = H * W
    assert W & (W - 1) == 0, "kernel computes col with a bitmask (W power of 2)"
    assert HW & (HW - 1) == 0, "kernel computes per-image pos with a bitmask"
    assert HW % 128 == 0, "lane-dense unmasked stores need HW % 128 == 0"

    if grid_steps is None:
        # One step on single-TC chips (v5e/v6e); one image per TensorCore on v7x.
        grid_steps = N if (_tensorcores_per_chip() > 1 and N > 1) else 1
    assert N % grid_steps == 0
    L = (N * HW) // grid_steps                # lane extent per grid step

    # Lane-concatenate the batch: (N,C,H,W) -> (C, N*HW).  KiB-scale reshuffle.
    x_lanes = jnp.transpose(x_nchw.reshape(N, C, HW), (1, 0, 2)).reshape(C, N * HW)

    # Fold the scalar x3 into the conv biases (valid because x3 is a scalar).
    b1p = (params["b1"] + x3).astype(jnp.float32).reshape(C, 1)
    b2p = (params["b2"] + x3).astype(jnp.float32).reshape(C, 1)
    w1m, w2m = params["w1_mat"], params["w2_mat"]
    w1a, w1b = w1m[:, :8 * C], w1m[:, 8 * C:]
    w2a, w2b = w2m[:, :8 * C], w2m[:, 8 * C:]

    kernel = functools.partial(_fused_model_kernel, H=H, W=W, C=C)
    # TODO(synk): on v7x verify in the trace that the 2-step grid is actually
    # split across the 2 TensorCores; if not, switch to pltpu.CORE_PARALLEL.
    out_lanes = pl.pallas_call(
        kernel,
        out_shape=jax.ShapeDtypeStruct((C, N * HW), jnp.float32),
        grid_spec=pltpu.PrefetchScalarGridSpec(
            num_scalar_prefetch=0,
            grid=(grid_steps,),
            in_specs=[
                pl.BlockSpec((C, L), lambda i: (0, i)),          # x, lane slab
                pl.BlockSpec((C, 8 * C), lambda i: (0, 0)),      # W1 taps 0..7
                pl.BlockSpec((C, C), lambda i: (0, 0)),          # W1 tap 8
                pl.BlockSpec((C, 8 * C), lambda i: (0, 0)),      # W2 taps 0..7
                pl.BlockSpec((C, C), lambda i: (0, 0)),          # W2 tap 8
                pl.BlockSpec((C, 1), lambda i: (0, 0)),          # bias1 + x3
                pl.BlockSpec((C, 1), lambda i: (0, 0)),          # bias2 + x3
            ],
            out_specs=pl.BlockSpec((C, L), lambda i: (0, i)),
            scratch_shapes=[pltpu.VMEM((8 * C, L), jnp.float32)],
        ),
        compiler_params=pltpu.CompilerParams(
            dimension_semantics=("parallel",)),
        cost_estimate=pl.CostEstimate(
            flops=3 * 2 * C * (9 * C) * HW * N,
            transcendentals=2 * N * C * HW,
            bytes_accessed=2 * N * C * HW * 4),
    )(x_lanes, w1a, w1b, w2a, w2b, b1p, b2p)

    return out_lanes.reshape(C, N, HW).transpose(1, 0, 2).reshape(N, C, H, W)


def _reference_forward(x_nchw, x3, params):
    """Pure-JAX reference using lax conv (NCHW/OIHW) for a correctness check."""
    def conv(x, w_oihw, b):
        y = lax.conv_general_dilated(
            x, w_oihw, window_strides=(1, 1), padding="SAME",
            dimension_numbers=("NCHW", "OIHW", "NCHW"))
        return y + b[None, :, None, None]
    v3 = jnp.tanh(conv(x_nchw, params["w1_oihw"], params["b1"]) + x3)
    v6 = jnp.tanh(conv(v3, params["w1_oihw"], params["b1"]) + x3)
    v9 = jnp.maximum(conv(v6, params["w2_oihw"], params["b2"]) + x3, 0.0)
    return v9


def init_params(key, C=16, k=3):
    # Deterministic Conv2d-style init: U(-1/sqrt(fan_in), 1/sqrt(fan_in)).
    fan_in = C * k * k
    bound = 1.0 / (fan_in ** 0.5)
    k1, k2, k3, k4 = jax.random.split(key, 4)
    w1 = jax.random.uniform(k1, (C, C, k, k), jnp.float32, -bound, bound)  # OIHW
    b1 = jax.random.uniform(k2, (C,), jnp.float32, -bound, bound)
    w2 = jax.random.uniform(k3, (C, C, k, k), jnp.float32, -bound, bound)
    b2 = jax.random.uniform(k4, (C,), jnp.float32, -bound, bound)
    return {
        "w1_oihw": w1, "b1": b1, "w2_oihw": w2, "b2": b2,
        # im2col weight matrices: rows = Cout, cols ordered (kh, kw, Cin) to
        # match the kernel's tap ordering (kh outer, kw inner, then channel).
        "w1_mat": jnp.transpose(w1, (0, 2, 3, 1)).reshape(C, 9 * C),
        "w2_mat": jnp.transpose(w2, (0, 2, 3, 1)).reshape(C, 9 * C),
    }


if __name__ == "__main__":
    key = jax.random.PRNGKey(0)
    kx, kp = jax.random.split(key)

    # Small shapes consistent with the module: C=16 fixed by the convs,
    # batch=2, 16x16 spatial.  x3 is the scalar operand from the original program.
    N, C, H, W = 2, 16, 16, 16
    x1 = jax.random.normal(kx, (N, C, H, W), jnp.float32)
    x3 = 2.0

    params = init_params(kp, C=C)

    out = jax.block_until_ready(model_forward(x1, x3, params))
    ref = jax.block_until_ready(_reference_forward(x1, x3, params))

    assert out.shape == (N, C, H, W)
    assert jnp.max(jnp.abs(out - ref)) < 1e-4, "mismatch vs JAX reference"

    print("KERNEL_OK")
</pallas_src>

<mosaic_0001>
module attributes {stable_mosaic.version = 11 : i64} {
  func.func @_fused_model_kernel(%arg0: i32, %arg1: memref<16x512xf32, #tpu.memory_space<vmem>>, %arg2: memref<16x128xf32, #tpu.memory_space<vmem>>, %arg3: memref<16x16xf32, #tpu.memory_space<vmem>>, %arg4: memref<16x128xf32, #tpu.memory_space<vmem>>, %arg5: memref<16x16xf32, #tpu.memory_space<vmem>>, %arg6: memref<16x1xf32, #tpu.memory_space<vmem>>, %arg7: memref<16x1xf32, #tpu.memory_space<vmem>>, %arg8: memref<16x512xf32, #tpu.memory_space<vmem>>, %arg9: memref<128x512xf32, #tpu.memory_space<vmem>>) attributes {dimension_semantics = [#tpu.dimension_semantics<parallel>], iteration_bounds = array<i64: 1>, scalar_prefetch = 0 : i64, scratch_operands = 1 : i64, tpu.core_type = #tpu.core_type<tc>, window_params = [{transform_indices = @transform_0, window_bounds = array<i64: 16, 512>}, {pipeline_mode = #tpu.pipeline_mode<synchronous>, transform_indices = @transform_1, window_bounds = array<i64: 16, 128>}, {pipeline_mode = #tpu.pipeline_mode<synchronous>, transform_indices = @transform_2, window_bounds = array<i64: 16, 16>}, {pipeline_mode = #tpu.pipeline_mode<synchronous>, transform_indices = @transform_3, window_bounds = array<i64: 16, 128>}, {pipeline_mode = #tpu.pipeline_mode<synchronous>, transform_indices = @transform_4, window_bounds = array<i64: 16, 16>}, {pipeline_mode = #tpu.pipeline_mode<synchronous>, transform_indices = @transform_5, window_bounds = array<i64: 16, 1>}, {pipeline_mode = #tpu.pipeline_mode<synchronous>, transform_indices = @transform_6, window_bounds = array<i64: 16, 1>}, {transform_indices = @transform_7, window_bounds = array<i64: 16, 512>}]} {
    %c0 = arith.constant 0 : index
    %c0_0 = arith.constant 0 : index
    %0 = vector.load %arg1[%c0, %c0_0] : memref<16x512xf32, #tpu.memory_space<vmem>>, vector<16x512xf32>
    %c0_1 = arith.constant 0 : index
    %c0_2 = arith.constant 0 : index
    %1 = vector.load %arg6[%c0_1, %c0_2] : memref<16x1xf32, #tpu.memory_space<vmem>>, vector<16x1xf32>
    %c0_3 = arith.constant 0 : index
    %c0_4 = arith.constant 0 : index
    %2 = vector.load %arg7[%c0_3, %c0_4] : memref<16x1xf32, #tpu.memory_space<vmem>>, vector<16x1xf32>
    %c0_5 = arith.constant 0 : index
    %c0_6 = arith.constant 0 : index
    %3 = vector.load %arg2[%c0_5, %c0_6] : memref<16x128xf32, #tpu.memory_space<vmem>>, vector<16x128xf32>
    %c0_7 = arith.constant 0 : index
    %c0_8 = arith.constant 0 : index
    %4 = vector.load %arg3[%c0_7, %c0_8] : memref<16x16xf32, #tpu.memory_space<vmem>>, vector<16x16xf32>
    %c0_9 = arith.constant 0 : index
    %c0_10 = arith.constant 0 : index
    %5 = vector.load %arg4[%c0_9, %c0_10] : memref<16x128xf32, #tpu.memory_space<vmem>>, vector<16x128xf32>
    %c0_11 = arith.constant 0 : index
    %c0_12 = arith.constant 0 : index
    %6 = vector.load %arg5[%c0_11, %c0_12] : memref<16x16xf32, #tpu.memory_space<vmem>>, vector<16x16xf32>
    %7 = tpu.iota {dimensions = array<i32: 1>} : vector<16x512xi32>
    %c255_i32 = arith.constant 255 : i32
    %8 = vector.broadcast %c255_i32 : i32 to vector<16x512xi32>
    %9 = arith.andi %7, %8 : vector<16x512xi32>
    %c15_i32 = arith.constant 15 : i32
    %10 = vector.broadcast %c15_i32 : i32 to vector<16x512xi32>
    %11 = arith.andi %7, %10 : vector<16x512xi32>
    %c16_i32 = arith.constant 16 : i32
    %12 = vector.broadcast %c16_i32 : i32 to vector<16x512xi32>
    %13 = arith.cmpi sge, %9, %12 : vector<16x512xi32>
    %c240_i32 = arith.constant 240 : i32
    %14 = vector.broadcast %c240_i32 : i32 to vector<16x512xi32>
    %15 = arith.cmpi slt, %9, %14 : vector<16x512xi32>
    %c1_i32 = arith.constant 1 : i32
    %16 = vector.broadcast %c1_i32 : i32 to vector<16x512xi32>
    %17 = arith.cmpi sge, %11, %16 : vector<16x512xi32>
    %c15_i32_13 = arith.constant 15 : i32
    %18 = vector.broadcast %c15_i32_13 : i32 to vector<16x512xi32>
    %19 = arith.cmpi slt, %11, %18 : vector<16x512xi32>
    %c17_i32 = arith.constant 17 : i32
    %20 = tpu.dynamic_rotate %0 by %c17_i32 dim 1 : vector<16x512xf32>, i32 -> vector<16x512xf32>
    %21 = arith.andi %13, %17 : vector<16x512xi1>
    %cst = arith.constant 0.000000e+00 : f32
    %22 = vector.broadcast %cst : f32 to vector<16x512xf32>
    %23 = arith.select %21, %20, %22 : vector<16x512xi1>, vector<16x512xf32>
    %c0_14 = arith.constant 0 : index
    %c0_15 = arith.constant 0 : index
    %24 = vector.load %arg9[%c0_14, %c0_15] : memref<128x512xf32, #tpu.memory_space<vmem>>, vector<16x512xf32>
    tpu.vector_store %arg9[%c0_14, %c0_15], %23 {strides = array<i32>} : memref<128x512xf32, #tpu.memory_space<vmem>>, vector<16x512xf32>,
    %c16_i32_16 = arith.constant 16 : i32
    %25 = tpu.dynamic_rotate %0 by %c16_i32_16 dim 1 : vector<16x512xf32>, i32 -> vector<16x512xf32>
    %cst_17 = arith.constant 0.000000e+00 : f32
    %26 = vector.broadcast %cst_17 : f32 to vector<16x512xf32>
    %27 = arith.select %13, %25, %26 : vector<16x512xi1>, vector<16x512xf32>
    %c16 = arith.constant 16 : index
    %c0_18 = arith.constant 0 : index
    %28 = vector.load %arg9[%c16, %c0_18] : memref<128x512xf32, #tpu.memory_space<vmem>>, vector<16x512xf32>
    tpu.vector_store %arg9[%c16, %c0_18], %27 {strides = array<i32>} : memref<128x512xf32, #tpu.memory_space<vmem>>, vector<16x512xf32>,
    %c15_i32_19 = arith.constant 15 : i32
    %29 = tpu.dynamic_rotate %0 by %c15_i32_19 dim 1 : vector<16x512xf32>, i32 -> vector<16x512xf32>
    %30 = arith.andi %13, %19 : vector<16x512xi1>
    %cst_20 = arith.constant 0.000000e+00 : f32
    %31 = vector.broadcast %cst_20 : f32 to vector<16x512xf32>
    %32 = arith.select %30, %29, %31 : vector<16x512xi1>, vector<16x512xf32>
    %c32 = arith.constant 32 : index
    %c0_21 = arith.constant 0 : index
    %33 = vector.load %arg9[%c32, %c0_21] : memref<128x512xf32, #tpu.memory_space<vmem>>, vector<16x512xf32>
    tpu.vector_store %arg9[%c32, %c0_21], %32 {strides = array<i32>} : memref<128x512xf32, #tpu.memory_space<vmem>>, vector<16x512xf32>,
    %c1_i32_22 = arith.constant 1 : i32
    %34 = tpu.dynamic_rotate %0 by %c1_i32_22 dim 1 : vector<16x512xf32>, i32 -> vector<16x512xf32>
    %cst_23 = arith.constant 0.000000e+00 : f32
    %35 = vector.broadcast %cst_23 : f32 to vector<16x512xf32>
    %36 = arith.select %17, %34, %35 : vector<16x512xi1>, vector<16x512xf32>
    %c48 = arith.constant 48 : index
    %c0_24 = arith.constant 0 : index
    %37 = vector.load %arg9[%c48, %c0_24] : memref<128x512xf32, #tpu.memory_space<vmem>>, vector<16x512xf32>
    tpu.vector_store %arg9[%c48, %c0_24], %36 {strides = array<i32>} : memref<128x512xf32, #tpu.memory_space<vmem>>, vector<16x512xf32>,
    %c64 = arith.constant 64 : index
    %c0_25 = arith.constant 0 : index
    %38 = vector.load %arg9[%c64, %c0_25] : memref<128x512xf32, #tpu.memory_space<vmem>>, vector<16x512xf32>
    tpu.vector_store %arg9[%c64, %c0_25], %0 {strides = array<i32>} : memref<128x512xf32, #tpu.memory_space<vmem>>, vector<16x512xf32>,
    %c511_i32 = arith.constant 511 : i32
    %39 = tpu.dynamic_rotate %0 by %c511_i32 dim 1 : vector<16x512xf32>, i32 -> vector<16x512xf32>
    %cst_26 = arith.constant 0.000000e+00 : f32
    %40 = vector.broadcast %cst_26 : f32 to vector<16x512xf32>
    %41 = arith.select %19, %39, %40 : vector<16x512xi1>, vector<16x512xf32>
    %c80 = arith.constant 80 : index
    %c0_27 = arith.constant 0 : index
    %42 = vector.load %arg9[%c80, %c0_27] : memref<128x512xf32, #tpu.memory_space<vmem>>, vector<16x512xf32>
    tpu.vector_store %arg9[%c80, %c0_27], %41 {strides = array<i32>} : memref<128x512xf32, #tpu.memory_space<vmem>>, vector<16x512xf32>,
    %c497_i32 = arith.constant 497 : i32
    %43 = tpu.dynamic_rotate %0 by %c497_i32 dim 1 : vector<16x512xf32>, i32 -> vector<16x512xf32>
    %44 = arith.andi %15, %17 : vector<16x512xi1>
    %cst_28 = arith.constant 0.000000e+00 : f32
    %45 = vector.broadcast %cst_28 : f32 to vector<16x512xf32>
    %46 = arith.select %44, %43, %45 : vector<16x512xi1>, vector<16x512xf32>
    %c96 = arith.constant 96 : index
    %c0_29 = arith.constant 0 : index
    %47 = vector.load %arg9[%c96, %c0_29] : memref<128x512xf32, #tpu.memory_space<vmem>>, vector<16x512xf32>
    tpu.vector_store %arg9[%c96, %c0_29], %46 {strides = array<i32>} : memref<128x512xf32, #tpu.memory_space<vmem>>, vector<16x512xf32>,
    %c496_i32 = arith.constant 496 : i32
    %48 = tpu.dynamic_rotate %0 by %c496_i32 dim 1 : vector<16x512xf32>, i32 -> vector<16x512xf32>
    %cst_30 = arith.constant 0.000000e+00 : f32
    %49 = vector.broadcast %cst_30 : f32 to vector<16x512xf32>
    %50 = arith.select %15, %48, %49 : vector<16x512xi1>, vector<16x512xf32>
    %c112 = arith.constant 112 : index
    %c0_31 = arith.constant 0 : index
    %51 = vector.load %arg9[%c112, %c0_31] : memref<128x512xf32, #tpu.memory_space<vmem>>, vector<16x512xf32>
    tpu.vector_store %arg9[%c112, %c0_31], %50 {strides = array<i32>} : memref<128x512xf32, #tpu.memory_space<vmem>>, vector<16x512xf32>,
    %c0_32 = arith.constant 0 : index
    %c0_33 = arith.constant 0 : index
    %52 = vector.load %arg9[%c0_32, %c0_33] : memref<128x512xf32, #tpu.memory_space<vmem>>, vector<128x512xf32>
    %cst_34 = arith.constant dense<0.000000e+00> : vector<16x512xf32>
    %53 = tpu.matmul %3, %52, %cst_34 {dimension_numbers = #tpu.dot_dimension_numbers<[1], [0], [0], [1], [0, 0, 1, 1], [], []>} : vector<16x128xf32>, vector<128x512xf32>, vector<16x512xf32> -> vector<16x512xf32>
    %c495_i32 = arith.constant 495 : i32
    %54 = tpu.dynamic_rotate %0 by %c495_i32 dim 1 : vector<16x512xf32>, i32 -> vector<16x512xf32>
    %55 = arith.andi %15, %19 : vector<16x512xi1>
    %cst_35 = arith.constant 0.000000e+00 : f32
    %56 = vector.broadcast %cst_35 : f32 to vector<16x512xf32>
    %57 = arith.select %55, %54, %56 : vector<16x512xi1>, vector<16x512xf32>
    %cst_36 = arith.constant dense<0.000000e+00> : vector<16x512xf32>
    %58 = tpu.matmul %4, %57, %cst_36 {dimension_numbers = #tpu.dot_dimension_numbers<[1], [0], [0], [1], [0, 0, 1, 1], [], []>} : vector<16x16xf32>, vector<16x512xf32>, vector<16x512xf32> -> vector<16x512xf32>
    %59 = arith.addf %53, %58 : vector<16x512xf32>
    %60 = vector.broadcast %1 : vector<16x1xf32> to vector<16x512xf32>
    %61 = arith.addf %59, %60 : vector<16x512xf32>
    %62 = math.tanh %61 : vector<16x512xf32>
    %c17_i32_37 = arith.constant 17 : i32
    %63 = tpu.dynamic_rotate %62 by %c17_i32_37 dim 1 : vector<16x512xf32>, i32 -> vector<16x512xf32>
    %64 = arith.andi %13, %17 : vector<16x512xi1>
    %cst_38 = arith.constant 0.000000e+00 : f32
    %65 = vector.broadcast %cst_38 : f32 to vector<16x512xf32>
    %66 = arith.select %64, %63, %65 : vector<16x512xi1>, vector<16x512xf32>
    %c0_39 = arith.constant 0 : index
    %c0_40 = arith.constant 0 : index
    %67 = vector.load %arg9[%c0_39, %c0_40] : memref<128x512xf32, #tpu.memory_space<vmem>>, vector<16x512xf32>
    tpu.vector_store %arg9[%c0_39, %c0_40], %66 {strides = array<i32>} : memref<128x512xf32, #tpu.memory_space<vmem>>, vector<16x512xf32>,
    %c16_i32_41 = arith.constant 16 : i32
    %68 = tpu.dynamic_rotate %62 by %c16_i32_41 dim 1 : vector<16x512xf32>, i32 -> vector<16x512xf32>
    %cst_42 = arith.constant 0.000000e+00 : f32
    %69 = vector.broadcast %cst_42 : f32 to vector<16x512xf32>
    %70 = arith.select %13, %68, %69 : vector<16x512xi1>, vector<16x512xf32>
    %c16_43 = arith.constant 16 : index
    %c0_44 = arith.constant 0 : index
    %71 = vector.load %arg9[%c16_43, %c0_44] : memref<128x512xf32, #tpu.memory_space<vmem>>, vector<16x512xf32>
    tpu.vector_store %arg9[%c16_43, %c0_44], %70 {strides = array<i32>} : memref<128x512xf32, #tpu.memory_space<vmem>>, vector<16x512xf32>,
    %c15_i32_45 = arith.constant 15 : i32
    %72 = tpu.dynamic_rotate %62 by %c15_i32_45 dim 1 : vector<16x512xf32>, i32 -> vector<16x512xf32>
    %73 = arith.andi %13, %19 : vector<16x512xi1>
    %cst_46 = arith.constant 0.000000e+00 : f32
    %74 = vector.broadcast %cst_46 : f32 to vector<16x512xf32>
    %75 = arith.select %73, %72, %74 : vector<16x512xi1>, vector<16x512xf32>
    %c32_47 = arith.constant 32 : index
    %c0_48 = arith.constant 0 : index
    %76 = vector.load %arg9[%c32_47, %c0_48] : memref<128x512xf32, #tpu.memory_space<vmem>>, vector<16x512xf32>
    tpu.vector_store %arg9[%c32_47, %c0_48], %75 {strides = array<i32>} : memref<128x512xf32, #tpu.memory_space<vmem>>, vector<16x512xf32>,
    %c1_i32_49 = arith.constant 1 : i32
    %77 = tpu.dynamic_rotate %62 by %c1_i32_49 dim 1 : vector<16x512xf32>, i32 -> vector<16x512xf32>
    %cst_50 = arith.constant 0.000000e+00 : f32
    %78 = vector.broadcast %cst_50 : f32 to vector<16x512xf32>
    %79 = arith.select %17, %77, %78 : vector<16x512xi1>, vector<16x512xf32>
    %c48_51 = arith.constant 48 : index
    %c0_52 = arith.constant 0 : index
    %80 = vector.load %arg9[%c48_51, %c0_52] : memref<128x512xf32, #tpu.memory_space<vmem>>, vector<16x512xf32>
    tpu.vector_store %arg9[%c48_51, %c0_52], %79 {strides = array<i32>} : memref<128x512xf32, #tpu.memory_space<vmem>>, vector<16x512xf32>,
    %c64_53 = arith.constant 64 : index
    %c0_54 = arith.constant 0 : index
    %81 = vector.load %arg9[%c64_53, %c0_54] : memref<128x512xf32, #tpu.memory_space<vmem>>, vector<16x512xf32>
    tpu.vector_store %arg9[%c64_53, %c0_54], %62 {strides = array<i32>} : memref<128x512xf32, #tpu.memory_space<vmem>>, vector<16x512xf32>,
    %c511_i32_55 = arith.constant 511 : i32
    %82 = tpu.dynamic_rotate %62 by %c511_i32_55 dim 1 : vector<16x512xf32>, i32 -> vector<16x512xf32>
    %cst_56 = arith.constant 0.000000e+00 : f32
    %83 = vector.broadcast %cst_56 : f32 to vector<16x512xf32>
    %84 = arith.select %19, %82, %83 : vector<16x512xi1>, vector<16x512xf32>
    %c80_57 = arith.constant 80 : index
    %c0_58 = arith.constant 0 : index
    %85 = vector.load %arg9[%c80_57, %c0_58] : memref<128x512xf32, #tpu.memory_space<vmem>>, vector<16x512xf32>
    tpu.vector_store %arg9[%c80_57, %c0_58], %84 {strides = array<i32>} : memref<128x512xf32, #tpu.memory_space<vmem>>, vector<16x512xf32>,
    %c497_i32_59 = arith.constant 497 : i32
    %86 = tpu.dynamic_rotate %62 by %c497_i32_59 dim 1 : vector<16x512xf32>, i32 -> vector<16x512xf32>
    %87 = arith.andi %15, %17 : vector<16x512xi1>
    %cst_60 = arith.constant 0.000000e+00 : f32
    %88 = vector.broadcast %cst_60 : f32 to vector<16x512xf32>
    %89 = arith.select %87, %86, %88 : vector<16x512xi1>, vector<16x512xf32>
    %c96_61 = arith.constant 96 : index
    %c0_62 = arith.constant 0 : index
    %90 = vector.load %arg9[%c96_61, %c0_62] : memref<128x512xf32, #tpu.memory_space<vmem>>, vector<16x512xf32>
    tpu.vector_store %arg9[%c96_61, %c0_62], %89 {strides = array<i32>} : memref<128x512xf32, #tpu.memory_space<vmem>>, vector<16x512xf32>,
    %c496_i32_63 = arith.constant 496 : i32
    %91 = tpu.dynamic_rotate %62 by %c496_i32_63 dim 1 : vector<16x512xf32>, i32 -> vector<16x512xf32>
    %cst_64 = arith.constant 0.000000e+00 : f32
    %92 = vector.broadcast %cst_64 : f32 to vector<16x512xf32>
    %93 = arith.select %15, %91, %92 : vector<16x512xi1>, vector<16x512xf32>
    %c112_65 = arith.constant 112 : index
    %c0_66 = arith.constant 0 : index
    %94 = vector.load %arg9[%c112_65, %c0_66] : memref<128x512xf32, #tpu.memory_space<vmem>>, vector<16x512xf32>
    tpu.vector_store %arg9[%c112_65, %c0_66], %93 {strides = array<i32>} : memref<128x512xf32, #tpu.memory_space<vmem>>, vector<16x512xf32>,
    %c0_67 = arith.constant 0 : index
    %c0_68 = arith.constant 0 : index
    %95 = vector.load %arg9[%c0_67, %c0_68] : memref<128x512xf32, #tpu.memory_space<vmem>>, vector<128x512xf32>
    %cst_69 = arith.constant dense<0.000000e+00> : vector<16x512xf32>
    %96 = tpu.matmul %3, %95, %cst_69 {dimension_numbers = #tpu.dot_dimension_numbers<[1], [0], [0], [1], [0, 0, 1, 1], [], []>} : vector<16x128xf32>, vector<128x512xf32>, vector<16x512xf32> -> vector<16x512xf32>
    %c495_i32_70 = arith.constant 495 : i32
    %97 = tpu.dynamic_rotate %62 by %c495_i32_70 dim 1 : vector<16x512xf32>, i32 -> vector<16x512xf32>
    %98 = arith.andi %15, %19 : vector<16x512xi1>
    %cst_71 = arith.constant 0.000000e+00 : f32
    %99 = vector.broadcast %cst_71 : f32 to vector<16x512xf32>
    %100 = arith.select %98, %97, %99 : vector<16x512xi1>, vector<16x512xf32>
    %cst_72 = arith.constant dense<0.000000e+00> : vector<16x512xf32>
    %101 = tpu.matmul %4, %100, %cst_72 {dimension_numbers = #tpu.dot_dimension_numbers<[1], [0], [0], [1], [0, 0, 1, 1], [], []>} : vector<16x16xf32>, vector<16x512xf32>, vector<16x512xf32> -> vector<16x512xf32>
    %102 = arith.addf %96, %101 : vector<16x512xf32>
    %103 = vector.broadcast %1 : vector<16x1xf32> to vector<16x512xf32>
    %104 = arith.addf %102, %103 : vector<16x512xf32>
    %105 = math.tanh %104 : vector<16x512xf32>
    %c17_i32_73 = arith.constant 17 : i32
    %106 = tpu.dynamic_rotate %105 by %c17_i32_73 dim 1 : vector<16x512xf32>, i32 -> vector<16x512xf32>
    %107 = arith.andi %13, %17 : vector<16x512xi1>
    %cst_74 = arith.constant 0.000000e+00 : f32
    %108 = vector.broadcast %cst_74 : f32 to vector<16x512xf32>
    %109 = arith.select %107, %106, %108 : vector<16x512xi1>, vector<16x512xf32>
    %c0_75 = arith.constant 0 : index
    %c0_76 = arith.constant 0 : index
    %110 = vector.load %arg9[%c0_75, %c0_76] : memref<128x512xf32, #tpu.memory_space<vmem>>, vector<16x512xf32>
    tpu.vector_store %arg9[%c0_75, %c0_76], %109 {strides = array<i32>} : memref<128x512xf32, #tpu.memory_space<vmem>>, vector<16x512xf32>,
    %c16_i32_77 = arith.constant 16 : i32
    %111 = tpu.dynamic_rotate %105 by %c16_i32_77 dim 1 : vector<16x512xf32>, i32 -> vector<16x512xf32>
    %cst_78 = arith.constant 0.000000e+00 : f32
    %112 = vector.broadcast %cst_78 : f32 to vector<16x512xf32>
    %113 = arith.select %13, %111, %112 : vector<16x512xi1>, vector<16x512xf32>
    %c16_79 = arith.constant 16 : index
    %c0_80 = arith.constant 0 : index
    %114 = vector.load %arg9[%c16_79, %c0_80] : memref<128x512xf32, #tpu.memory_space<vmem>>, vector<16x512xf32>
    tpu.vector_store %arg9[%c16_79, %c0_80], %113 {strides = array<i32>} : memref<128x512xf32, #tpu.memory_space<vmem>>, vector<16x512xf32>,
    %c15_i32_81 = arith.constant 15 : i32
    %115 = tpu.dynamic_rotate %105 by %c15_i32_81 dim 1 : vector<16x512xf32>, i32 -> vector<16x512xf32>
    %116 = arith.andi %13, %19 : vector<16x512xi1>
    %cst_82 = arith.constant 0.000000e+00 : f32
    %117 = vector.broadcast %cst_82 : f32 to vector<16x512xf32>
    %118 = arith.select %116, %115, %117 : vector<16x512xi1>, vector<16x512xf32>
    %c32_83 = arith.constant 32 : index
    %c0_84 = arith.constant 0 : index
    %119 = vector.load %arg9[%c32_83, %c0_84] : memref<128x512xf32, #tpu.memory_space<vmem>>, vector<16x512xf32>
    tpu.vector_store %arg9[%c32_83, %c0_84], %118 {strides = array<i32>} : memref<128x512xf32, #tpu.memory_space<vmem>>, vector<16x512xf32>,
    %c1_i32_85 = arith.constant 1 : i32
    %120 = tpu.dynamic_rotate %105 by %c1_i32_85 dim 1 : vector<16x512xf32>, i32 -> vector<16x512xf32>
    %cst_86 = arith.constant 0.000000e+00 : f32
    %121 = vector.broadcast %cst_86 : f32 to vector<16x512xf32>
    %122 = arith.select %17, %120, %121 : vector<16x512xi1>, vector<16x512xf32>
    %c48_87 = arith.constant 48 : index
    %c0_88 = arith.constant 0 : index
    %123 = vector.load %arg9[%c48_87, %c0_88] : memref<128x512xf32, #tpu.memory_space<vmem>>, vector<16x512xf32>
    tpu.vector_store %arg9[%c48_87, %c0_88], %122 {strides = array<i32>} : memref<128x512xf32, #tpu.memory_space<vmem>>, vector<16x512xf32>,
    %c64_89 = arith.constant 64 : index
    %c0_90 = arith.constant 0 : index
    %124 = vector.load %arg9[%c64_89, %c0_90] : memref<128x512xf32, #tpu.memory_space<vmem>>, vector<16x512xf32>
    tpu.vector_store %arg9[%c64_89, %c0_90], %105 {strides = array<i32>} : memref<128x512xf32, #tpu.memory_space<vmem>>, vector<16x512xf32>,
    %c511_i32_91 = arith.constant 511 : i32
    %125 = tpu.dynamic_rotate %105 by %c511_i32_91 dim 1 : vector<16x512xf32>, i32 -> vector<16x512xf32>
    %cst_92 = arith.constant 0.000000e+00 : f32
    %126 = vector.broadcast %cst_92 : f32 to vector<16x512xf32>
    %127 = arith.select %19, %125, %126 : vector<16x512xi1>, vector<16x512xf32>
    %c80_93 = arith.constant 80 : index
    %c0_94 = arith.constant 0 : index
    %128 = vector.load %arg9[%c80_93, %c0_94] : memref<128x512xf32, #tpu.memory_space<vmem>>, vector<16x512xf32>
    tpu.vector_store %arg9[%c80_93, %c0_94], %127 {strides = array<i32>} : memref<128x512xf32, #tpu.memory_space<vmem>>, vector<16x512xf32>,
    %c497_i32_95 = arith.constant 497 : i32
    %129 = tpu.dynamic_rotate %105 by %c497_i32_95 dim 1 : vector<16x512xf32>, i32 -> vector<16x512xf32>
    %130 = arith.andi %15, %17 : vector<16x512xi1>
    %cst_96 = arith.constant 0.000000e+00 : f32
    %131 = vector.broadcast %cst_96 : f32 to vector<16x512xf32>
    %132 = arith.select %130, %129, %131 : vector<16x512xi1>, vector<16x512xf32>
    %c96_97 = arith.constant 96 : index
    %c0_98 = arith.constant 0 : index
    %133 = vector.load %arg9[%c96_97, %c0_98] : memref<128x512xf32, #tpu.memory_space<vmem>>, vector<16x512xf32>
    tpu.vector_store %arg9[%c96_97, %c0_98], %132 {strides = array<i32>} : memref<128x512xf32, #tpu.memory_space<vmem>>, vector<16x512xf32>,
    %c496_i32_99 = arith.constant 496 : i32
    %134 = tpu.dynamic_rotate %105 by %c496_i32_99 dim 1 : vector<16x512xf32>, i32 -> vector<16x512xf32>
    %cst_100 = arith.constant 0.000000e+00 : f32
    %135 = vector.broadcast %cst_100 : f32 to vector<16x512xf32>
    %136 = arith.select %15, %134, %135 : vector<16x512xi1>, vector<16x512xf32>
    %c112_101 = arith.constant 112 : index
    %c0_102 = arith.constant 0 : index
    %137 = vector.load %arg9[%c112_101, %c0_102] : memref<128x512xf32, #tpu.memory_space<vmem>>, vector<16x512xf32>
    tpu.vector_store %arg9[%c112_101, %c0_102], %136 {strides = array<i32>} : memref<128x512xf32, #tpu.memory_space<vmem>>, vector<16x512xf32>,
    %c0_103 = arith.constant 0 : index
    %c0_104 = arith.constant 0 : index
    %138 = vector.load %arg9[%c0_103, %c0_104] : memref<128x512xf32, #tpu.memory_space<vmem>>, vector<128x512xf32>
    %cst_105 = arith.constant dense<0.000000e+00> : vector<16x512xf32>
    %139 = tpu.matmul %5, %138, %cst_105 {dimension_numbers = #tpu.dot_dimension_numbers<[1], [0], [0], [1], [0, 0, 1, 1], [], []>} : vector<16x128xf32>, vector<128x512xf32>, vector<16x512xf32> -> vector<16x512xf32>
    %c495_i32_106 = arith.constant 495 : i32
    %140 = tpu.dynamic_rotate %105 by %c495_i32_106 dim 1 : vector<16x512xf32>, i32 -> vector<16x512xf32>
    %141 = arith.andi %15, %19 : vector<16x512xi1>
    %cst_107 = arith.constant 0.000000e+00 : f32
    %142 = vector.broadcast %cst_107 : f32 to vector<16x512xf32>
    %143 = arith.select %141, %140, %142 : vector<16x512xi1>, vector<16x512xf32>
    %cst_108 = arith.constant dense<0.000000e+00> : vector<16x512xf32>
    %144 = tpu.matmul %6, %143, %cst_108 {dimension_numbers = #tpu.dot_dimension_numbers<[1], [0], [0], [1], [0, 0, 1, 1], [], []>} : vector<16x16xf32>, vector<16x512xf32>, vector<16x512xf32> -> vector<16x512xf32>
    %145 = arith.addf %139, %144 : vector<16x512xf32>
    %146 = vector.broadcast %2 : vector<16x1xf32> to vector<16x512xf32>
    %147 = arith.addf %145, %146 : vector<16x512xf32>
    %cst_109 = arith.constant 0.000000e+00 : f32
    %148 = vector.broadcast %cst_109 : f32 to vector<16x512xf32>
    %149 = arith.maximumf %147, %148 : vector<16x512xf32>
    %c0_110 = arith.constant 0 : index
    %c0_111 = arith.constant 0 : index
    %150 = vector.load %arg8[%c0_110, %c0_111] : memref<16x512xf32, #tpu.memory_space<vmem>>, vector<16x512xf32>
    tpu.vector_store %arg8[%c0_110, %c0_111], %149 {strides = array<i32>} : memref<16x512xf32, #tpu.memory_space<vmem>>, vector<16x512xf32>,
    return
  }
  func.func @transform_0(%arg0: i32) -> (i32, i32) {
    %c0_i32 = arith.constant 0 : i32
    %c0_i32_0 = arith.constant 0 : i32
    return %c0_i32, %arg0 : i32, i32
  }
  func.func @transform_1(%arg0: i32) -> (i32, i32) {
    %c0_i32 = arith.constant 0 : i32
    %c0_i32_0 = arith.constant 0 : i32
    %c0_i32_1 = arith.constant 0 : i32
    return %c0_i32, %c0_i32_0 : i32, i32
  }
  func.func @transform_2(%arg0: i32) -> (i32, i32) {
    %c0_i32 = arith.constant 0 : i32
    %c0_i32_0 = arith.constant 0 : i32
    %c0_i32_1 = arith.constant 0 : i32
    return %c0_i32, %c0_i32_0 : i32, i32
  }
  func.func @transform_3(%arg0: i32) -> (i32, i32) {
    %c0_i32 = arith.constant 0 : i32
    %c0_i32_0 = arith.constant 0 : i32
    %c0_i32_1 = arith.constant 0 : i32
    return %c0_i32, %c0_i32_0 : i32, i32
  }
  func.func @transform_4(%arg0: i32) -> (i32, i32) {
    %c0_i32 = arith.constant 0 : i32
    %c0_i32_0 = arith.constant 0 : i32
    %c0_i32_1 = arith.constant 0 : i32
    return %c0_i32, %c0_i32_0 : i32, i32
  }
  func.func @transform_5(%arg0: i32) -> (i32, i32) {
    %c0_i32 = arith.constant 0 : i32
    %c0_i32_0 = arith.constant 0 : i32
    %c0_i32_1 = arith.constant 0 : i32
    return %c0_i32, %c0_i32_0 : i32, i32
  }
  func.func @transform_6(%arg0: i32) -> (i32, i32) {
    %c0_i32 = arith.constant 0 : i32
    %c0_i32_0 = arith.constant 0 : i32
    %c0_i32_1 = arith.constant 0 : i32
    return %c0_i32, %c0_i32_0 : i32, i32
  }
  func.func @transform_7(%arg0: i32) -> (i32, i32) {
    %c0_i32 = arith.constant 0 : i32
    %c0_i32_0 = arith.constant 0 : i32
    return %c0_i32, %arg0 : i32, i32
  }
}

</mosaic_0001>

<llo_original>
// kernel: tpu_custom_call.1
$region0: #{tpu_custom_call.1}
  #allocation0 [shape = 'u32[]', space=smem, size = 0x4, offset = 0x4, fixed_abs, tag = 'smem constant byte address 0x4 - core index']
  #allocation1 [shape = 'u32[144,128]{1,0:T(1,128)}', space=vmem, size = 0x12000, scoped, tag = 'internal scratch']
  #allocation2 [shape = 'f32[128,512]{1,0:T(8,128)}', space=vmem, size = 0x40000, scoped, tag = 'scratch operand']
  %s0 = inlined_call_operand.hbm [shape: f32[16,512], index: 0, kind: input, shape index: {}]
  %s1 = inlined_call_operand.vmem [shape: f32[16,128], index: 1, kind: input, shape index: {}]
  %s2 = inlined_call_operand.vmem [shape: f32[16,16], index: 2, kind: input, shape index: {}]
  %s3 = inlined_call_operand.hbm [shape: f32[16,128], index: 3, kind: input, shape index: {}]
  %s4 = inlined_call_operand.vmem [shape: f32[16,16], index: 4, kind: input, shape index: {}]
  %s5 = inlined_call_operand.vmem [shape: f32[16,1], index: 5, kind: input, shape index: {}]
  %s6 = inlined_call_operand.vmem [shape: f32[16,1], index: 6, kind: input, shape index: {}]
  %s7 = inlined_call_operand.hbm [shape: f32[16,512], index: 7, kind: output, shape index: {}]
  %s8 = sld [smem:[#allocation0]]
  $region46: #{tpu_custom_call.1} parent=0
    _
  %s10 = ssub.s32 1, %s8
  %s11 = scalar_select 0, %s10, %s8
  $region1: #{tpu_custom_call.1} parent=0
    #allocation3 [shape = 'u8[32768]{0}', space=vmem, size = 0x8000, scoped, tag = 'input window, operand 0, single buffered']
    #allocation4 [shape = 's32[1]{0}', space=sflag, size = 0x4, scoped, tag = 'scoped memory for tpu_custom_call.1']
    #allocation5 [shape = 's32[1]{0}', space=sflag, size = 0x4, scoped, tag = 'scoped memory for tpu_custom_call.1']
    #allocation6 [shape = 'u8[8192]{0}', space=vmem, size = 0x2000, scoped, tag = 'input window, operand 3, single buffered']
    #allocation7 [shape = 's32[1]{0}', space=sflag, size = 0x4, scoped, tag = 'scoped memory for tpu_custom_call.1']
    #allocation8 [shape = 'u8[32768]{0}', space=vmem, size = 0x8000, scoped, tag = 'output window, operand 0, single buffered']
    %12 = vsyncpa [#allocation4], 0
    %13 = vsyncpa [#allocation7], 0
    %14 = vsyncpa [#allocation5], 0
    // Predicated region
    $region2: #{tpu_custom_call.1} parent=1 // pred_check
      _
    $region3: #{tpu_custom_call.1} parent=1 // pred_check_branch
      %16 = sbr.rel (0) target = $region5
    $region4: #{tpu_custom_call.1} parent=1 // pred_region
      %s18 = ssub.s32 1024, 1024
      %19 = vsyncadd [#allocation4], %s18
      %s20 = sshll.u32 [#allocation3], 4
      %s21 = int_to_ptr.vmem [resolvable:$true] %s20
      %26 = dma.hbm_to_vmem [thread:$0]  %s0, 1024, %s21, [#allocation4], 512, 512, 32
    $region5: #{tpu_custom_call.1} parent=1 // pred_fallthru
      _
    // Predicated region
    $region6: #{tpu_custom_call.1} parent=1 // pred_check
      _
    $region7: #{tpu_custom_call.1} parent=1 // pred_check_branch
      %28 = sbr.rel (0) target = $region9
    $region8: #{tpu_custom_call.1} parent=1 // pred_region
      _
    $region9: #{tpu_custom_call.1} parent=1 // pred_fallthru
      _
    // Predicated region
    $region10: #{tpu_custom_call.1} parent=1 // pred_check
      _
    $region11: #{tpu_custom_call.1} parent=1 // pred_check_branch
      %30 = sbr.rel (0) target = $region13
    $region12: #{tpu_custom_call.1} parent=1 // pred_region
      _
    $region13: #{tpu_custom_call.1} parent=1 // pred_fallthru
      _
    // Predicated region
    $region14: #{tpu_custom_call.1} parent=1 // pred_check
      _
    $region15: #{tpu_custom_call.1} parent=1 // pred_check_branch
      %32 = sbr.rel (0) target = $region17
    $region16: #{tpu_custom_call.1} parent=1 // pred_region
      %s34 = ssub.s32 256, 256
      %35 = vsyncadd [#allocation7], %s34
      %s36 = sshll.u32 [#allocation6], 4
      %s37 = int_to_ptr.vmem [resolvable:$true] %s36
      %42 = dma.hbm_to_vmem [thread:$0]  %s3, 256, %s37, [#allocation7], 128, 128, 8
    $region17: #{tpu_custom_call.1} parent=1 // pred_fallthru
      _
    // Predicated region
    $region18: #{tpu_custom_call.1} parent=1 // pred_check
      _
    $region19: #{tpu_custom_call.1} parent=1 // pred_check_branch
      %44 = sbr.rel (0) target = $region21
    $region20: #{tpu_custom_call.1} parent=1 // pred_region
      _
    $region21: #{tpu_custom_call.1} parent=1 // pred_fallthru
      _
    // Predicated region
    $region22: #{tpu_custom_call.1} parent=1 // pred_check
      _
    $region23: #{tpu_custom_call.1} parent=1 // pred_check_branch
      %46 = sbr.rel (0) target = $region25
    $region24: #{tpu_custom_call.1} parent=1 // pred_region
      _
    $region25: #{tpu_custom_call.1} parent=1 // pred_fallthru
      _
    // Predicated region
    $region26: #{tpu_custom_call.1} parent=1 // pred_check
      _
    $region27: #{tpu_custom_call.1} parent=1 // pred_check_branch
      %48 = sbr.rel (0) target = $region29
    $region28: #{tpu_custom_call.1} parent=1 // pred_region
      _
    $region29: #{tpu_custom_call.1} parent=1 // pred_fallthru
      _
    // Predicated region
    $region30: #{tpu_custom_call.1} parent=1 // pred_check
      _
    $region31: #{tpu_custom_call.1} parent=1 // pred_check_branch
      %50 = sbr.rel (0) target = $region33
    $region32: #{tpu_custom_call.1} parent=1 // pred_region
      %51 = dma.done [#allocation4], 1024
    $region33: #{tpu_custom_call.1} parent=1 // pred_fallthru
      _
    // Predicated region
    $region34: #{tpu_custom_call.1} parent=1 // pred_check
      _
    $region35: #{tpu_custom_call.1} parent=1 // pred_check_branch
      %53 = sbr.rel (0) target = $region37
    $region36: #{tpu_custom_call.1} parent=1 // pred_region
      %54 = dma.done [#allocation7], 256
    $region37: #{tpu_custom_call.1} parent=1 // pred_fallthru
      _
    %v55 = vld [vmem:[#allocation3] sm:$0xff]
    %v56 = vld [vmem:[#allocation3 + $0x8] sm:$0xff]
    %v57 = vld [vmem:[#allocation3 + $0x10] sm:$0xff]
    %v58 = vld [vmem:[#allocation3 + $0x18] sm:$0xff]
    %v59 = vld [vmem:[#allocation3 + $0x20] sm:$0xff]
    %v60 = vld [vmem:[#allocation3 + $0x28] sm:$0xff]
    %v61 = vld [vmem:[#allocation3 + $0x30] sm:$0xff]
    %v62 = vld [vmem:[#allocation3 + $0x38] sm:$0xff]
    %v63 = vld [vmem:[%s5] sm:$0xff]
    %v64 = vld [vmem:[%s5 + $0x8] sm:$0xff]
    %v65 = vld [vmem:[%s6] sm:$0xff]
    %v66 = vld [vmem:[%s6 + $0x8] sm:$0xff]
    %v67 = vld [vmem:[%s1] sm:$0xff]
    %v68 = vld [vmem:[%s1 + $0x8] sm:$0xff]
    %v69 = vld [vmem:[%s2] sm:$0xff]
    %v70 = vld [vmem:[%s2 + $0x8] sm:$0xff]
    %v71 = vld [vmem:[#allocation6] sm:$0xff]
    %v72 = vld [vmem:[#allocation6 + $0x8] sm:$0xff]
    %v73 = vld [vmem:[%s4] sm:$0xff]
    %v74 = vld [vmem:[%s4 + $0x8] sm:$0xff]
    %v75 = vlaneseq
    %v76 = vand.u32 %v75, 127
    %v77 = vadd.s32 %v76, 128
    %v78 = vadd.s32 %v76, 256
    %v79 = vadd.s32 %v76, 384
    %v80 = vand.u32 %v76, 255
    %v81 = vand.u32 %v77, 255
    %v82 = vand.u32 %v78, 255
    %v83 = vand.u32 %v79, 255
    %v84 = vand.u32 %v76, 15
    %v85 = vand.u32 %v77, 15
    %v86 = vand.u32 %v78, 15
    %v87 = vand.u32 %v79, 15
    %vm88 = vcmp.ge.s32.totalorder %v80, 16
    %vm89 = vcmp.ge.s32.totalorder %v81, 16
    %vm90 = vcmp.ge.s32.totalorder %v82, 16
    %vm91 = vcmp.ge.s32.totalorder %v83, 16
    %vm92 = vcmp.lt.s32.totalorder %v80, 240
    %vm93 = vcmp.lt.s32.totalorder %v81, 240
    %vm94 = vcmp.lt.s32.totalorder %v82, 240
    %vm95 = vcmp.lt.s32.totalorder %v83, 240
    %vm96 = vcmp.ge.s32.totalorder %v84, 1
    %vm97 = vcmp.ge.s32.totalorder %v85, 1
    %vm98 = vcmp.ge.s32.totalorder %v86, 1
    %vm99 = vcmp.ge.s32.totalorder %v87, 1
    %vm100 = vcmp.lt.s32.totalorder %v84, 15
    %vm101 = vcmp.lt.s32.totalorder %v85, 15
    %vm102 = vcmp.lt.s32.totalorder %v86, 15
    %vm103 = vcmp.lt.s32.totalorder %v87, 15
    %104 = vrot.lane.b32.xlu0 %v55, 17
    %v105 = vpop.permute.xlu0 %104
    %106 = vrot.lane.b32.xlu0 %v59, 17
    %v107 = vpop.permute.xlu0 %106
    %108 = vrot.lane.b32.xlu0 %v56, 17
    %v109 = vpop.permute.xlu0 %108
    %110 = vrot.lane.b32.xlu0 %v60, 17
    %v111 = vpop.permute.xlu0 %110
    %112 = vrot.lane.b32.xlu0 %v57, 17
    %v113 = vpop.permute.xlu0 %112
    %114 = vrot.lane.b32.xlu0 %v61, 17
    %v115 = vpop.permute.xlu0 %114
    %116 = vrot.lane.b32.xlu0 %v58, 17
    %v117 = vpop.permute.xlu0 %116
    %118 = vrot.lane.b32.xlu0 %v62, 17
    %v119 = vpop.permute.xlu0 %118
    %vm120 = vcmp.lt.s32.totalorder %v76, 17
    %v121 = vsel %vm120, %v113, %v117
    %v122 = vsel %vm120, %v115, %v119
    %v123 = vsel %vm120, %v109, %v113
    %v124 = vsel %vm120, %v111, %v115
    %v125 = vsel %vm120, %v105, %v109
    %v126 = vsel %vm120, %v107, %v111
    %v127 = vsel %vm120, %v117, %v105
    %v128 = vsel %vm120, %v119, %v107
    %vm129 = vmand %vm88, %vm96
    %vm130 = vmand %vm89, %vm97
    %vm131 = vmand %vm90, %vm98
    %vm132 = vmand %vm91, %vm99
    %v133 = vsel %vm129, %v127, 0.0
    %v134 = vsel %vm130, %v125, 0.0
    %v135 = vsel %vm131, %v123, 0.0
    %v136 = vsel %vm132, %v121, 0.0
    %v137 = vsel %vm129, %v128, 0.0
    %v138 = vsel %vm130, %v126, 0.0
    %v139 = vsel %vm131, %v124, 0.0
    %v140 = vsel %vm132, %v122, 0.0
    %141 = vst [vmem:[#allocation2] sm:$0xff] %v133
    %142 = vst [vmem:[#allocation2 + $0x8] sm:$0xff] %v134
    %143 = vst [vmem:[#allocation2 + $0x10] sm:$0xff] %v135
    %144 = vst [vmem:[#allocation2 + $0x18] sm:$0xff] %v136
    %145 = vst [vmem:[#allocation2 + $0x20] sm:$0xff] %v137
    %146 = vst [vmem:[#allocation2 + $0x28] sm:$0xff] %v138
    %147 = vst [vmem:[#allocation2 + $0x30] sm:$0xff] %v139
    %148 = vst [vmem:[#allocation2 + $0x38] sm:$0xff] %v140
    %149 = vrot.lane.b32.xlu0 %v55, 16
    %v150 = vpop.permute.xlu0 %149
    %151 = vrot.lane.b32.xlu0 %v59, 16
    %v152 = vpop.permute.xlu0 %151
    %153 = vrot.lane.b32.xlu0 %v56, 16
    %v154 = vpop.permute.xlu0 %153
    %155 = vrot.lane.b32.xlu0 %v60, 16
    %v156 = vpop.permute.xlu0 %155
    %157 = vrot.lane.b32.xlu0 %v57, 16
    %v158 = vpop.permute.xlu0 %157
    %159 = vrot.lane.b32.xlu0 %v61, 16
    %v160 = vpop.permute.xlu0 %159
    %161 = vrot.lane.b32.xlu0 %v58, 16
    %v162 = vpop.permute.xlu0 %161
    %163 = vrot.lane.b32.xlu0 %v62, 16
    %v164 = vpop.permute.xlu0 %163
    %vm165 = vcmp.lt.s32.totalorder %v76, 16
    %v166 = vsel %vm165, %v158, %v162
    %v167 = vsel %vm165, %v160, %v164
    %v168 = vsel %vm165, %v154, %v158
    %v169 = vsel %vm165, %v156, %v160
    %v170 = vsel %vm165, %v150, %v154
    %v171 = vsel %vm165, %v152, %v156
    %v172 = vsel %vm165, %v162, %v150
    %v173 = vsel %vm165, %v164, %v152
    %v174 = vsel %vm88, %v172, 0.0
    %v175 = vsel %vm89, %v170, 0.0
    %v176 = vsel %vm90, %v168, 0.0
    %v177 = vsel %vm91, %v166, 0.0
    %v178 = vsel %vm88, %v173, 0.0
    %v179 = vsel %vm89, %v171, 0.0
    %v180 = vsel %vm90, %v169, 0.0
    %v181 = vsel %vm91, %v167, 0.0
    %182 = vst [vmem:[#allocation2 + $0x40] sm:$0xff] %v174
    %183 = vst [vmem:[#allocation2 + $0x48] sm:$0xff] %v175
    %184 = vst [vmem:[#allocation2 + $0x50] sm:$0xff] %v176
    %185 = vst [vmem:[#allocation2 + $0x58] sm:$0xff] %v177
    %186 = vst [vmem:[#allocation2 + $0x60] sm:$0xff] %v178
    %187 = vst [vmem:[#allocation2 + $0x68] sm:$0xff] %v179
    %188 = vst [vmem:[#allocation2 + $0x70] sm:$0xff] %v180
    %189 = vst [vmem:[#allocation2 + $0x78] sm:$0xff] %v181
    %190 = vrot.lane.b32.xlu0 %v55, 15
    %v191 = vpop.permute.xlu0 %190
    %192 = vrot.lane.b32.xlu0 %v59, 15
    %v193 = vpop.permute.xlu0 %192
    %194 = vrot.lane.b32.xlu0 %v56, 15
    %v195 = vpop.permute.xlu0 %194
    %196 = vrot.lane.b32.xlu0 %v60, 15
    %v197 = vpop.permute.xlu0 %196
    %198 = vrot.lane.b32.xlu0 %v57, 15
    %v199 = vpop.permute.xlu0 %198
    %200 = vrot.lane.b32.xlu0 %v61, 15
    %v201 = vpop.permute.xlu0 %200
    %202 = vrot.lane.b32.xlu0 %v58, 15
    %v203 = vpop.permute.xlu0 %202
    %204 = vrot.lane.b32.xlu0 %v62, 15
    %v205 = vpop.permute.xlu0 %204
    %vm206 = vcmp.lt.s32.totalorder %v76, 15
    %v207 = vsel %vm206, %v199, %v203
    %v208 = vsel %vm206, %v201, %v205
    %v209 = vsel %vm206, %v195, %v199
    %v210 = vsel %vm206, %v197, %v201
    %v211 = vsel %vm206, %v191, %v195
    %v212 = vsel %vm206, %v193, %v197
    %v213 = vsel %vm206, %v203, %v191
    %v214 = vsel %vm206, %v205, %v193
    %vm215 = vmand %vm88, %vm100
    %vm216 = vmand %vm89, %vm101
    %vm217 = vmand %vm90, %vm102
    %vm218 = vmand %vm91, %vm103
    %v219 = vsel %vm215, %v213, 0.0
    %v220 = vsel %vm216, %v211, 0.0
    %v221 = vsel %vm217, %v209, 0.0
    %v222 = vsel %vm218, %v207, 0.0
    %v223 = vsel %vm215, %v214, 0.0
    %v224 = vsel %vm216, %v212, 0.0
    %v225 = vsel %vm217, %v210, 0.0
    %v226 = vsel %vm218, %v208, 0.0
    %227 = vst [vmem:[#allocation2 + $0x80] sm:$0xff] %v219
    %228 = vst [vmem:[#allocation2 + $0x88] sm:$0xff] %v220
    %229 = vst [vmem:[#allocation2 + $0x90] sm:$0xff] %v221
    %230 = vst [vmem:[#allocation2 + $0x98] sm:$0xff] %v222
    %231 = vst [vmem:[#allocation2 + $0xa0] sm:$0xff] %v223
    %232 = vst [vmem:[#allocation2 + $0xa8] sm:$0xff] %v224
    %233 = vst [vmem:[#allocation2 + $0xb0] sm:$0xff] %v225
    %234 = vst [vmem:[#allocation2 + $0xb8] sm:$0xff] %v226
    %235 = vrot.lane.b32.xlu0 %v55, 1
    %v236 = vpop.permute.xlu0 %235
    %237 = vrot.lane.b32.xlu0 %v59, 1
    %v238 = vpop.permute.xlu0 %237
    %239 = vrot.lane.b32.xlu0 %v56, 1
    %v240 = vpop.permute.xlu0 %239
    %241 = vrot.lane.b32.xlu0 %v60, 1
    %v242 = vpop.permute.xlu0 %241
    %243 = vrot.lane.b32.xlu0 %v57, 1
    %v244 = vpop.permute.xlu0 %243
    %245 = vrot.lane.b32.xlu0 %v61, 1
    %v246 = vpop.permute.xlu0 %245
    %247 = vrot.lane.b32.xlu0 %v58, 1
    %v248 = vpop.permute.xlu0 %247
    %249 = vrot.lane.b32.xlu0 %v62, 1
    %v250 = vpop.permute.xlu0 %249
    %vm251 = vcmp.lt.s32.totalorder %v76, 1
    %v252 = vsel %vm251, %v244, %v248
    %v253 = vsel %vm251, %v246, %v250
    %v254 = vsel %vm251, %v240, %v244
    %v255 = vsel %vm251, %v242, %v246
    %v256 = vsel %vm251, %v236, %v240
    %v257 = vsel %vm251, %v238, %v242
    %v258 = vsel %vm251, %v248, %v236
    %v259 = vsel %vm251, %v250, %v238
    %v260 = vsel %vm96, %v258, 0.0
    %v261 = vsel %vm97, %v256, 0.0
    %v262 = vsel %vm98, %v254, 0.0
    %v263 = vsel %vm99, %v252, 0.0
    %v264 = vsel %vm96, %v259, 0.0
    %v265 = vsel %vm97, %v257, 0.0
    %v266 = vsel %vm98, %v255, 0.0
    %v267 = vsel %vm99, %v253, 0.0
    %268 = vst [vmem:[#allocation2 + $0xc0] sm:$0xff] %v260
    %269 = vst [vmem:[#allocation2 + $0xc8] sm:$0xff] %v261
    %270 = vst [vmem:[#allocation2 + $0xd0] sm:$0xff] %v262
    %271 = vst [vmem:[#allocation2 + $0xd8] sm:$0xff] %v263
    %272 = vst [vmem:[#allocation2 + $0xe0] sm:$0xff] %v264
    %273 = vst [vmem:[#allocation2 + $0xe8] sm:$0xff] %v265
    %274 = vst [vmem:[#allocation2 + $0xf0] sm:$0xff] %v266
    %275 = vst [vmem:[#allocation2 + $0xf8] sm:$0xff] %v267
    %276 = vst [vmem:[#allocation2 + $0x100] sm:$0xff] %v55
    %277 = vst [vmem:[#allocation2 + $0x108] sm:$0xff] %v56
    %278 = vst [vmem:[#allocation2 + $0x110] sm:$0xff] %v57
    %279 = vst [vmem:[#allocation2 + $0x118] sm:$0xff] %v58
    %280 = vst [vmem:[#allocation2 + $0x120] sm:$0xff] %v59
    %281 = vst [vmem:[#allocation2 + $0x128] sm:$0xff] %v60
    %282 = vst [vmem:[#allocation2 + $0x130] sm:$0xff] %v61
    %283 = vst [vmem:[#allocation2 + $0x138] sm:$0xff] %v62
    %284 = vrot.lane.b32.xlu0 %v55, 127
    %v285 = vpop.permute.xlu0 %284
    %286 = vrot.lane.b32.xlu0 %v59, 127
    %v287 = vpop.permute.xlu0 %286
    %288 = vrot.lane.b32.xlu0 %v56, 127
    %v289 = vpop.permute.xlu0 %288
    %290 = vrot.lane.b32.xlu0 %v60, 127
    %v291 = vpop.permute.xlu0 %290
    %292 = vrot.lane.b32.xlu0 %v57, 127
    %v293 = vpop.permute.xlu0 %292
    %294 = vrot.lane.b32.xlu0 %v61, 127
    %v295 = vpop.permute.xlu0 %294
    %296 = vrot.lane.b32.xlu0 %v58, 127
    %v297 = vpop.permute.xlu0 %296
    %298 = vrot.lane.b32.xlu0 %v62, 127
    %v299 = vpop.permute.xlu0 %298
    %vm300 = vcmp.lt.s32.totalorder %v76, 127
    %v301 = vsel %vm300, %v293, %v297
    %v302 = vsel %vm300, %v295, %v299
    %v303 = vsel %vm300, %v289, %v293
    %v304 = vsel %vm300, %v291, %v295
    %v305 = vsel %vm300, %v285, %v289
    %v306 = vsel %vm300, %v287, %v291
    %v307 = vsel %vm300, %v297, %v285
    %v308 = vsel %vm300, %v299, %v287
    %v309 = vsel %vm100, %v305, 0.0
    %v310 = vsel %vm101, %v303, 0.0
    %v311 = vsel %vm102, %v301, 0.0
    %v312 = vsel %vm103, %v307, 0.0
    %v313 = vsel %vm100, %v306, 0.0
    %v314 = vsel %vm101, %v304, 0.0
    %v315 = vsel %vm102, %v302, 0.0
    %v316 = vsel %vm103, %v308, 0.0
    %317 = vst [vmem:[#allocation2 + $0x140] sm:$0xff] %v309
    %318 = vst [vmem:[#allocation2 + $0x148] sm:$0xff] %v310
    %319 = vst [vmem:[#allocation2 + $0x150] sm:$0xff] %v311
    %320 = vst [vmem:[#allocation2 + $0x158] sm:$0xff] %v312
    %321 = vst [vmem:[#allocation2 + $0x160] sm:$0xff] %v313
    %322 = vst [vmem:[#allocation2 + $0x168] sm:$0xff] %v314
    %323 = vst [vmem:[#allocation2 + $0x170] sm:$0xff] %v315
    %324 = vst [vmem:[#allocation2 + $0x178] sm:$0xff] %v316
    %325 = vrot.lane.b32.xlu0 %v55, 113
    %v326 = vpop.permute.xlu0 %325
    %327 = vrot.lane.b32.xlu0 %v59, 113
    %v328 = vpop.permute.xlu0 %327
    %329 = vrot.lane.b32.xlu0 %v56, 113
    %v330 = vpop.permute.xlu0 %329
    %331 = vrot.lane.b32.xlu0 %v60, 113
    %v332 = vpop.permute.xlu0 %331
    %333 = vrot.lane.b32.xlu0 %v57, 113
    %v334 = vpop.permute.xlu0 %333
    %335 = vrot.lane.b32.xlu0 %v61, 113
    %v336 = vpop.permute.xlu0 %335
    %337 = vrot.lane.b32.xlu0 %v58, 113
    %v338 = vpop.permute.xlu0 %337
    %339 = vrot.lane.b32.xlu0 %v62, 113
    %v340 = vpop.permute.xlu0 %339
    %vm341 = vcmp.lt.s32.totalorder %v76, 113
    %v342 = vsel %vm341, %v334, %v338
    %v343 = vsel %vm341, %v336, %v340
    %v344 = vsel %vm341, %v330, %v334
    %v345 = vsel %vm341, %v332, %v336
    %v346 = vsel %vm341, %v326, %v330
    %v347 = vsel %vm341, %v328, %v332
    %v348 = vsel %vm341, %v338, %v326
    %v349 = vsel %vm341, %v340, %v328
    %vm350 = vmand %vm92, %vm96
    %vm351 = vmand %vm93, %vm97
    %vm352 = vmand %vm94, %vm98
    %vm353 = vmand %vm95, %vm99
    %v354 = vsel %vm350, %v346, 0.0
    %v355 = vsel %vm351, %v344, 0.0
    %v356 = vsel %vm352, %v342, 0.0
    %v357 = vsel %vm353, %v348, 0.0
    %v358 = vsel %vm350, %v347, 0.0
    %v359 = vsel %vm351, %v345, 0.0
    %v360 = vsel %vm352, %v343, 0.0
    %v361 = vsel %vm353, %v349, 0.0
    %362 = vst [vmem:[#allocation2 + $0x180] sm:$0xff] %v354
    %363 = vst [vmem:[#allocation2 + $0x188] sm:$0xff] %v355
    %364 = vst [vmem:[#allocation2 + $0x190] sm:$0xff] %v356
    %365 = vst [vmem:[#allocation2 + $0x198] sm:$0xff] %v357
    %366 = vst [vmem:[#allocation2 + $0x1a0] sm:$0xff] %v358
    %367 = vst [vmem:[#allocation2 + $0x1a8] sm:$0xff] %v359
    %368 = vst [vmem:[#allocation2 + $0x1b0] sm:$0xff] %v360
    %369 = vst [vmem:[#allocation2 + $0x1b8] sm:$0xff] %v361
    %370 = vrot.lane.b32.xlu0 %v55, 112
    %v371 = vpop.permute.xlu0 %370
    %372 = vrot.lane.b32.xlu0 %v59, 112
    %v373 = vpop.permute.xlu0 %372
    %374 = vrot.lane.b32.xlu0 %v56, 112
    %v375 = vpop.permute.xlu0 %374
    %376 = vrot.lane.b32.xlu0 %v60, 112
    %v377 = vpop.permute.xlu0 %376
    %378 = vrot.lane.b32.xlu0 %v57, 112
    %v379 = vpop.permute.xlu0 %378
    %380 = vrot.lane.b32.xlu0 %v61, 112
    %v381 = vpop.permute.xlu0 %380
    %382 = vrot.lane.b32.xlu0 %v58, 112
    %v383 = vpop.permute.xlu0 %382
    %384 = vrot.lane.b32.xlu0 %v62, 112
    %v385 = vpop.permute.xlu0 %384
    %vm386 = vcmp.lt.s32.totalorder %v76, 112
    %v387 = vsel %vm386, %v379, %v383
    %v388 = vsel %vm386, %v381, %v385
    %v389 = vsel %vm386, %v375, %v379
    %v390 = vsel %vm386, %v377, %v381
    %v391 = vsel %vm386, %v371, %v375
    %v392 = vsel %vm386, %v373, %v377
    %v393 = vsel %vm386, %v383, %v371
    %v394 = vsel %vm386, %v385, %v373
    %v395 = vsel %vm92, %v391, 0.0
    %v396 = vsel %vm93, %v389, 0.0
    %v397 = vsel %vm94, %v387, 0.0
    %v398 = vsel %vm95, %v393, 0.0
    %v399 = vsel %vm92, %v392, 0.0
    %v400 = vsel %vm93, %v390, 0.0
    %v401 = vsel %vm94, %v388, 0.0
    %v402 = vsel %vm95, %v394, 0.0
    %403 = vst [vmem:[#allocation2 + $0x1c0] sm:$0xff] %v395
    %404 = vst [vmem:[#allocation2 + $0x1c8] sm:$0xff] %v396
    %405 = vst [vmem:[#allocation2 + $0x1d0] sm:$0xff] %v397
    %406 = vst [vmem:[#allocation2 + $0x1d8] sm:$0xff] %v398
    %407 = vst [vmem:[#allocation2 + $0x1e0] sm:$0xff] %v399
    %408 = vst [vmem:[#allocation2 + $0x1e8] sm:$0xff] %v400
    %409 = vst [vmem:[#allocation2 + $0x1f0] sm:$0xff] %v401
    %410 = vst [vmem:[#allocation2 + $0x1f8] sm:$0xff] %v402
    %v411 = vld [vmem:[#allocation2] sm:$0xff]
    %v412 = vld [vmem:[#allocation2 + $0x8] sm:$0xff]
    %v413 = vld [vmem:[#allocation2 + $0x10] sm:$0xff]
    %v414 = vld [vmem:[#allocation2 + $0x18] sm:$0xff]
    %v415 = vld [vmem:[#allocation2 + $0x20] sm:$0xff]
    %v416 = vld [vmem:[#allocation2 + $0x28] sm:$0xff]
    %v417 = vld [vmem:[#allocation2 + $0x30] sm:$0xff]
    %v418 = vld [vmem:[#allocation2 + $0x38] sm:$0xff]
    %v419 = vld [vmem:[#allocation2 + $0x40] sm:$0xff]
    %v420 = vld [vmem:[#allocation2 + $0x48] sm:$0xff]
    %v421 = vld [vmem:[#allocation2 + $0x50] sm:$0xff]
    %v422 = vld [vmem:[#allocation2 + $0x58] sm:$0xff]
    %v423 = vld [vmem:[#allocation2 + $0x60] sm:$0xff]
    %v424 = vld [vmem:[#allocation2 + $0x68] sm:$0xff]
    %v425 = vld [vmem:[#allocation2 + $0x70] sm:$0xff]
    %v426 = vld [vmem:[#allocation2 + $0x78] sm:$0xff]
    %v427 = vld [vmem:[#allocation2 + $0x80] sm:$0xff]
    %v428 = vld [vmem:[#allocation2 + $0x88] sm:$0xff]
    %v429 = vld [vmem:[#allocation2 + $0x90] sm:$0xff]
    %v430 = vld [vmem:[#allocation2 + $0x98] sm:$0xff]
    %v431 = vld [vmem:[#allocation2 + $0xa0] sm:$0xff]
    %v432 = vld [vmem:[#allocation2 + $0xa8] sm:$0xff]
    %v433 = vld [vmem:[#allocation2 + $0xb0] sm:$0xff]
    %v434 = vld [vmem:[#allocation2 + $0xb8] sm:$0xff]
    %v435 = vld [vmem:[#allocation2 + $0xc0] sm:$0xff]
    %v436 = vld [vmem:[#allocation2 + $0xc8] sm:$0xff]
    %v437 = vld [vmem:[#allocation2 + $0xd0] sm:$0xff]
    %v438 = vld [vmem:[#allocation2 + $0xd8] sm:$0xff]
    %v439 = vld [vmem:[#allocation2 + $0xe0] sm:$0xff]
    %v440 = vld [vmem:[#allocation2 + $0xe8] sm:$0xff]
    %v441 = vld [vmem:[#allocation2 + $0xf0] sm:$0xff]
    %v442 = vld [vmem:[#allocation2 + $0xf8] sm:$0xff]
    %v443 = vld [vmem:[#allocation2 + $0x100] sm:$0xff]
    %v444 = vld [vmem:[#allocation2 + $0x108] sm:$0xff]
    %v445 = vld [vmem:[#allocation2 + $0x110] sm:$0xff]
    %v446 = vld [vmem:[#allocation2 + $0x118] sm:$0xff]
    %v447 = vld [vmem:[#allocation2 + $0x120] sm:$0xff]
    %v448 = vld [vmem:[#allocation2 + $0x128] sm:$0xff]
    %v449 = vld [vmem:[#allocation2 + $0x130] sm:$0xff]
    %v450 = vld [vmem:[#allocation2 + $0x138] sm:$0xff]
    %v451 = vld [vmem:[#allocation2 + $0x140] sm:$0xff]
    %v452 = vld [vmem:[#allocation2 + $0x148] sm:$0xff]
    %v453 = vld [vmem:[#allocation2 + $0x150] sm:$0xff]
    %v454 = vld [vmem:[#allocation2 + $0x158] sm:$0xff]
    %v455 = vld [vmem:[#allocation2 + $0x160] sm:$0xff]
    %v456 = vld [vmem:[#allocation2 + $0x168] sm:$0xff]
    %v457 = vld [vmem:[#allocation2 + $0x170] sm:$0xff]
    %v458 = vld [vmem:[#allocation2 + $0x178] sm:$0xff]
    %v459 = vld [vmem:[#allocation2 + $0x180] sm:$0xff]
    %v460 = vld [vmem:[#allocation2 + $0x188] sm:$0xff]
    %v461 = vld [vmem:[#allocation2 + $0x190] sm:$0xff]
    %v462 = vld [vmem:[#allocation2 + $0x198] sm:$0xff]
    %v463 = vld [vmem:[#allocation2 + $0x1a0] sm:$0xff]
    %v464 = vld [vmem:[#allocation2 + $0x1a8] sm:$0xff]
    %v465 = vld [vmem:[#allocation2 + $0x1b0] sm:$0xff]
    %v466 = vld [vmem:[#allocation2 + $0x1b8] sm:$0xff]
    %v467 = vld [vmem:[#allocation2 + $0x1c0] sm:$0xff]
    %v468 = vld [vmem:[#allocation2 + $0x1c8] sm:$0xff]
    %v469 = vld [vmem:[#allocation2 + $0x1d0] sm:$0xff]
    %v470 = vld [vmem:[#allocation2 + $0x1d8] sm:$0xff]
    %v471 = vld [vmem:[#allocation2 + $0x1e0] sm:$0xff]
    %v472 = vld [vmem:[#allocation2 + $0x1e8] sm:$0xff]
    %v473 = vld [vmem:[#allocation2 + $0x1f0] sm:$0xff]
    %v474 = vld [vmem:[#allocation2 + $0x1f8] sm:$0xff]
    %475 = vrot.lane.b32.xlu0 %v55, 111
    %v476 = vpop.permute.xlu0 %475
    %477 = vrot.lane.b32.xlu0 %v59, 111
    %v478 = vpop.permute.xlu0 %477
    %479 = vrot.lane.b32.xlu0 %v56, 111
    %v480 = vpop.permute.xlu0 %479
    %481 = vrot.lane.b32.xlu0 %v60, 111
    %v482 = vpop.permute.xlu0 %481
    %483 = vrot.lane.b32.xlu0 %v57, 111
    %v484 = vpop.permute.xlu0 %483
    %485 = vrot.lane.b32.xlu0 %v61, 111
    %v486 = vpop.permute.xlu0 %485
    %487 = vrot.lane.b32.xlu0 %v58, 111
    %v488 = vpop.permute.xlu0 %487
    %489 = vrot.lane.b32.xlu0 %v62, 111
    %v490 = vpop.permute.xlu0 %489
    %vm491 = vcmp.lt.s32.totalorder %v76, 111
    %v492 = vsel %vm491, %v484, %v488
    %v493 = vsel %vm491, %v486, %v490
    %v494 = vsel %vm491, %v480, %v484
    %v495 = vsel %vm491, %v482, %v486
    %v496 = vsel %vm491, %v476, %v480
    %v497 = vsel %vm491, %v478, %v482
    %v498 = vsel %vm491, %v488, %v476
    %v499 = vsel %vm491, %v490, %v478
    %vm500 = vmand %vm92, %vm100
    %vm501 = vmand %vm93, %vm101
    %vm502 = vmand %vm94, %vm102
    %vm503 = vmand %vm95, %vm103
    %v504 = vsel %vm500, %v496, 0.0
    %v505 = vsel %vm501, %v494, 0.0
    %v506 = vsel %vm502, %v492, 0.0
    %v507 = vsel %vm503, %v498, 0.0
    %v508 = vsel %vm500, %v497, 0.0
    %v509 = vsel %vm501, %v495, 0.0
    %v510 = vsel %vm502, %v493, 0.0
    %v511 = vsel %vm503, %v499, 0.0
    %vm512 = vcmask 130048
    %v514 = vsel %vm512, %v69, 0
    %v517 = vsel %vm512, %v70, 0
    %519 = vmatprep.subr.mxu0 %v505
    %520 = vmatpush1.msra.mxu0 %v504
    %521 = vmatprep.subr.mxu0 %v509
    %522 = vmatpush1.msra.mxu0 %v508
    %523 = vmatprep.subr.mxu0 0.0
    %524 = vmatpush1.msra.mxu0 0.0
    %525 = vmatprep.subr.mxu0 0.0
    %526 = vmatpush1.msra.mxu0 0.0
    %527 = vmatprep.subr.mxu0 0.0
    %528 = vmatpush1.msra.mxu0 0.0
    %529 = vmatprep.subr.mxu0 0.0
    %530 = vmatpush1.msra.mxu0 0.0
    %531 = vmatprep.subr.mxu0 0.0
    %532 = vmatpush1.msra.mxu0 0.0
    %533 = vmatprep.subr.mxu0 0.0
    %534 = vmatpush1.msra.mxu0 0.0
    %535 = vmatprep.subr.mxu0 0.0
    %536 = vmatpush1.msra.mxu0 0.0
    %537 = vmatprep.subr.mxu0 0.0
    %538 = vmatpush1.msra.mxu0 0.0
    %539 = vmatprep.subr.mxu0 0.0
    %540 = vmatpush1.msra.mxu0 0.0
    %541 = vmatprep.subr.mxu0 0.0
    %542 = vmatpush1.msra.mxu0 0.0
    %543 = vmatprep.subr.mxu0 0.0
    %544 = vmatpush1.msra.mxu0 0.0
    %545 = vmatprep.subr.mxu0 0.0
    %546 = vmatpush1.msra.mxu0 0.0
    %547 = vmatprep.subr.mxu0 0.0
    %548 = vmatpush1.msra.mxu0 0.0
    %549 = vmatprep.subr.mxu0 0.0
    %550 = vmatpush1.msra.mxu0 0.0
    %551 = vmatprep.subr.mxu0 0.0
    %552 = vmatpush1.msra.mxu0 0.0
    %553 = vmatprep.subr.mxu0 0.0
    %554 = vmatpush1.msra.mxu0 0.0
    %555 = vmatprep.subr.mxu0 0.0
    %556 = vmatpush1.msra.mxu0 0.0
    %557 = vmatprep.subr.mxu0 0.0
    %558 = vmatpush1.msra.mxu0 0.0
    %559 = vmatprep.subr.mxu0 0.0
    %560 = vmatpush1.msra.mxu0 0.0
    %561 = vmatprep.subr.mxu0 0.0
    %562 = vmatpush1.msra.mxu0 0.0
    %563 = vmatprep.subr.mxu0 0.0
    %564 = vmatpush1.msra.mxu0 0.0
    %565 = vmatprep.subr.mxu0 0.0
    %566 = vmatpush1.msra.mxu0 0.0
    %567 = vmatprep.subr.mxu0 0.0
    %568 = vmatpush1.msra.mxu0 0.0
    %569 = vmatprep.subr.mxu0 0.0
    %570 = vmatpush1.msra.mxu0 0.0
    %571 = vmatprep.subr.mxu0 0.0
    %572 = vmatpush1.msra.mxu0 0.0
    %573 = vmatprep.subr.mxu0 0.0
    %574 = vmatpush1.msra.mxu0 0.0
    %575 = vmatprep.subr.mxu0 0.0
    %576 = vmatpush1.msra.mxu0 0.0
    %577 = vmatprep.subr.mxu0 0.0
    %578 = vmatpush1.msra.mxu0 0.0
    %579 = vmatprep.subr.mxu0 0.0
    %580 = vmatpush1.msra.mxu0 0.0
    %581 = vmatprep.subr.mxu0 0.0
    %582 = vmatpush1.msra.mxu0 0.0
    %583 = vmatprep.mubr.f32.mxu0 0.0
    %584 = vmatmul.mubr.f32.gmra.mrb[0].mxu0 %v514
    %v585 = vpop.f32.mrb[0].mxu0
    %v586 = vadd.f32 0.0, %v585
    %v587 = vpop.f32.mrb[0].mxu0
    %v588 = vadd.f32 0.0, %v587
    %589 = vmatprep.mubr.f32.mxu0 0.0
    %590 = vmatmul.mubr.f32.gmra.mrb[0].mxu0 %v517
    %v591 = vpop.f32.mrb[0].mxu0
    %v592 = vadd.f32 0.0, %v591
    %v593 = vpop.f32.mrb[0].mxu0
    %v594 = vadd.f32 0.0, %v593
    %595 = vdwg.mxu0
    %596 = vmatprep.subr.mxu0 %v507
    %597 = vmatpush1.msra.mxu0 %v506
    %598 = vmatprep.subr.mxu0 %v511
    %599 = vmatpush1.msra.mxu0 %v510
    %600 = vmatprep.subr.mxu0 0.0
    %601 = vmatpush1.msra.mxu0 0.0
    %602 = vmatprep.subr.mxu0 0.0
    %603 = vmatpush1.msra.mxu0 0.0
    %604 = vmatprep.subr.mxu0 0.0
    %605 = vmatpush1.msra.mxu0 0.0
    %606 = vmatprep.subr.mxu0 0.0
    %607 = vmatpush1.msra.mxu0 0.0
    %608 = vmatprep.subr.mxu0 0.0
    %609 = vmatpush1.msra.mxu0 0.0
    %610 = vmatprep.subr.mxu0 0.0
    %611 = vmatpush1.msra.mxu0 0.0
    %612 = vmatprep.subr.mxu0 0.0
    %613 = vmatpush1.msra.mxu0 0.0
    %614 = vmatprep.subr.mxu0 0.0
    %615 = vmatpush1.msra.mxu0 0.0
    %616 = vmatprep.subr.mxu0 0.0
    %617 = vmatpush1.msra.mxu0 0.0
    %618 = vmatprep.subr.mxu0 0.0
    %619 = vmatpush1.msra.mxu0 0.0
    %620 = vmatprep.subr.mxu0 0.0
    %621 = vmatpush1.msra.mxu0 0.0
    %622 = vmatprep.subr.mxu0 0.0
    %623 = vmatpush1.msra.mxu0 0.0
    %624 = vmatprep.subr.mxu0 0.0
    %625 = vmatpush1.msra.mxu0 0.0
    %626 = vmatprep.subr.mxu0 0.0
    %627 = vmatpush1.msra.mxu0 0.0
    %628 = vmatprep.subr.mxu0 0.0
    %629 = vmatpush1.msra.mxu0 0.0
    %630 = vmatprep.subr.mxu0 0.0
    %631 = vmatpush1.msra.mxu0 0.0
    %632 = vmatprep.subr.mxu0 0.0
    %633 = vmatpush1.msra.mxu0 0.0
    %634 = vmatprep.subr.mxu0 0.0
    %635 = vmatpush1.msra.mxu0 0.0
    %636 = vmatprep.subr.mxu0 0.0
    %637 = vmatpush1.msra.mxu0 0.0
    %638 = vmatprep.subr.mxu0 0.0
    %639 = vmatpush1.msra.mxu0 0.0
    %640 = vmatprep.subr.mxu0 0.0
    %641 = vmatpush1.msra.mxu0 0.0
    %642 = vmatprep.subr.mxu0 0.0
    %643 = vmatpush1.msra.mxu0 0.0
    %644 = vmatprep.subr.mxu0 0.0
    %645 = vmatpush1.msra.mxu0 0.0
    %646 = vmatprep.subr.mxu0 0.0
    %647 = vmatpush1.msra.mxu0 0.0
    %648 = vmatprep.subr.mxu0 0.0
    %649 = vmatpush1.msra.mxu0 0.0
    %650 = vmatprep.subr.mxu0 0.0
    %651 = vmatpush1.msra.mxu0 0.0
    %652 = vmatprep.subr.mxu0 0.0
    %653 = vmatpush1.msra.mxu0 0.0
    %654 = vmatprep.subr.mxu0 0.0
    %655 = vmatpush1.msra.mxu0 0.0
    %656 = vmatprep.subr.mxu0 0.0
    %657 = vmatpush1.msra.mxu0 0.0
    %658 = vmatprep.subr.mxu0 0.0
    %659 = vmatpush1.msra.mxu0 0.0
    %660 = vmatprep.mubr.f32.mxu0 0.0
    %661 = vmatmul.mubr.f32.gmra.mrb[0].mxu0 %v514
    %v662 = vpop.f32.mrb[0].mxu0
    %v663 = vadd.f32 0.0, %v662
    %v664 = vpop.f32.mrb[0].mxu0
    %v665 = vadd.f32 0.0, %v664
    %666 = vmatprep.mubr.f32.mxu0 0.0
    %667 = vmatmul.mubr.f32.gmra.mrb[0].mxu0 %v517
    %v668 = vpop.f32.mrb[0].mxu0
    %v669 = vadd.f32 0.0, %v668
    %v670 = vpop.f32.mrb[0].mxu0
    %v671 = vadd.f32 0.0, %v670
    %672 = vdwg.mxu0
    %673 = vmatprep.subr.mxu0 %v412
    %674 = vmatpush1.msra.mxu0 %v411
    %675 = vmatprep.subr.mxu0 %v416
    %676 = vmatpush1.msra.mxu0 %v415
    %677 = vmatprep.subr.mxu0 %v420
    %678 = vmatpush1.msra.mxu0 %v419
    %679 = vmatprep.subr.mxu0 %v424
    %680 = vmatpush1.msra.mxu0 %v423
    %681 = vmatprep.subr.mxu0 %v428
    %682 = vmatpush1.msra.mxu0 %v427
    %683 = vmatprep.subr.mxu0 %v432
    %684 = vmatpush1.msra.mxu0 %v431
    %685 = vmatprep.subr.mxu0 %v436
    %686 = vmatpush1.msra.mxu0 %v435
    %687 = vmatprep.subr.mxu0 %v440
    %688 = vmatpush1.msra.mxu0 %v439
    %689 = vmatprep.subr.mxu0 %v444
    %690 = vmatpush1.msra.mxu0 %v443
    %691 = vmatprep.subr.mxu0 %v448
    %692 = vmatpush1.msra.mxu0 %v447
    %693 = vmatprep.subr.mxu0 %v452
    %694 = vmatpush1.msra.mxu0 %v451
    %695 = vmatprep.subr.mxu0 %v456
    %696 = vmatpush1.msra.mxu0 %v455
    %697 = vmatprep.subr.mxu0 %v460
    %698 = vmatpush1.msra.mxu0 %v459
    %699 = vmatprep.subr.mxu0 %v464
    %700 = vmatpush1.msra.mxu0 %v463
    %701 = vmatprep.subr.mxu0 %v468
    %702 = vmatpush1.msra.mxu0 %v467
    %703 = vmatprep.subr.mxu0 %v472
    %704 = vmatpush1.msra.mxu0 %v471
    %705 = vmatprep.subr.mxu0 0.0
    %706 = vmatpush1.msra.mxu0 0.0
    %707 = vmatprep.subr.mxu0 0.0
    %708 = vmatpush1.msra.mxu0 0.0
    %709 = vmatprep.subr.mxu0 0.0
    %710 = vmatpush1.msra.mxu0 0.0
    %711 = vmatprep.subr.mxu0 0.0
    %712 = vmatpush1.msra.mxu0 0.0
    %713 = vmatprep.subr.mxu0 0.0
    %714 = vmatpush1.msra.mxu0 0.0
    %715 = vmatprep.subr.mxu0 0.0
    %716 = vmatpush1.msra.mxu0 0.0
    %717 = vmatprep.subr.mxu0 0.0
    %718 = vmatpush1.msra.mxu0 0.0
    %719 = vmatprep.subr.mxu0 0.0
    %720 = vmatpush1.msra.mxu0 0.0
    %721 = vmatprep.subr.mxu0 0.0
    %722 = vmatpush1.msra.mxu0 0.0
    %723 = vmatprep.subr.mxu0 0.0
    %724 = vmatpush1.msra.mxu0 0.0
    %725 = vmatprep.subr.mxu0 0.0
    %726 = vmatpush1.msra.mxu0 0.0
    %727 = vmatprep.subr.mxu0 0.0
    %728 = vmatpush1.msra.mxu0 0.0
    %729 = vmatprep.subr.mxu0 0.0
    %730 = vmatpush1.msra.mxu0 0.0
    %731 = vmatprep.subr.mxu0 0.0
    %732 = vmatpush1.msra.mxu0 0.0
    %733 = vmatprep.subr.mxu0 0.0
    %734 = vmatpush1.msra.mxu0 0.0
    %735 = vmatprep.subr.mxu0 0.0
    %736 = vmatpush1.msra.mxu0 0.0
    %737 = vmatprep.mubr.f32.mxu0 0.0
    %738 = vmatmul.mubr.f32.gmra.mrb[0].mxu0 %v67
    %v739 = vpop.f32.mrb[0].mxu0
    %v740 = vadd.f32 %v586, %v739
    %v741 = vpop.f32.mrb[0].mxu0
    %v742 = vadd.f32 %v588, %v741
    %743 = vmatprep.mubr.f32.mxu0 0.0
    %744 = vmatmul.mubr.f32.gmra.mrb[0].mxu0 %v68
    %v745 = vpop.f32.mrb[0].mxu0
    %v746 = vadd.f32 %v592, %v745
    %v747 = vpop.f32.mrb[0].mxu0
    %v748 = vadd.f32 %v594, %v747
    %749 = vdwg.mxu0
    %750 = vmatprep.subr.mxu0 %v414
    %751 = vmatpush1.msra.mxu0 %v413
    %752 = vmatprep.subr.mxu0 %v418
    %753 = vmatpush1.msra.mxu0 %v417
    %754 = vmatprep.subr.mxu0 %v422
    %755 = vmatpush1.msra.mxu0 %v421
    %756 = vmatprep.subr.mxu0 %v426
    %757 = vmatpush1.msra.mxu0 %v425
    %758 = vmatprep.subr.mxu0 %v430
    %759 = vmatpush1.msra.mxu0 %v429
    %760 = vmatprep.subr.mxu0 %v434
    %761 = vmatpush1.msra.mxu0 %v433
    %762 = vmatprep.subr.mxu0 %v438
    %763 = vmatpush1.msra.mxu0 %v437
    %764 = vmatprep.subr.mxu0 %v442
    %765 = vmatpush1.msra.mxu0 %v441
    %766 = vmatprep.subr.mxu0 %v446
    %767 = vmatpush1.msra.mxu0 %v445
    %768 = vmatprep.subr.mxu0 %v450
    %769 = vmatpush1.msra.mxu0 %v449
    %770 = vmatprep.subr.mxu0 %v454
    %771 = vmatpush1.msra.mxu0 %v453
    %772 = vmatprep.subr.mxu0 %v458
    %773 = vmatpush1.msra.mxu0 %v457
    %774 = vmatprep.subr.mxu0 %v462
    %775 = vmatpush1.msra.mxu0 %v461
    %776 = vmatprep.subr.mxu0 %v466
    %777 = vmatpush1.msra.mxu0 %v465
    %778 = vmatprep.subr.mxu0 %v470
    %779 = vmatpush1.msra.mxu0 %v469
    %780 = vmatprep.subr.mxu0 %v474
    %781 = vmatpush1.msra.mxu0 %v473
    %782 = vmatprep.subr.mxu0 0.0
    %783 = vmatpush1.msra.mxu0 0.0
    %784 = vmatprep.subr.mxu0 0.0
    %785 = vmatpush1.msra.mxu0 0.0
    %786 = vmatprep.subr.mxu0 0.0
    %787 = vmatpush1.msra.mxu0 0.0
    %788 = vmatprep.subr.mxu0 0.0
    %789 = vmatpush1.msra.mxu0 0.0
    %790 = vmatprep.subr.mxu0 0.0
    %791 = vmatpush1.msra.mxu0 0.0
    %792 = vmatprep.subr.mxu0 0.0
    %793 = vmatpush1.msra.mxu0 0.0
    %794 = vmatprep.subr.mxu0 0.0
    %795 = vmatpush1.msra.mxu0 0.0
    %796 = vmatprep.subr.mxu0 0.0
    %797 = vmatpush1.msra.mxu0 0.0
    %798 = vmatprep.subr.mxu0 0.0
    %799 = vmatpush1.msra.mxu0 0.0
    %800 = vmatprep.subr.mxu0 0.0
    %801 = vmatpush1.msra.mxu0 0.0
    %802 = vmatprep.subr.mxu0 0.0
    %803 = vmatpush1.msra.mxu0 0.0
    %804 = vmatprep.subr.mxu0 0.0
    %805 = vmatpush1.msra.mxu0 0.0
    %806 = vmatprep.subr.mxu0 0.0
    %807 = vmatpush1.msra.mxu0 0.0
    %808 = vmatprep.subr.mxu0 0.0
    %809 = vmatpush1.msra.mxu0 0.0
    %810 = vmatprep.subr.mxu0 0.0
    %811 = vmatpush1.msra.mxu0 0.0
    %812 = vmatprep.subr.mxu0 0.0
    %813 = vmatpush1.msra.mxu0 0.0
    %814 = vmatprep.mubr.f32.mxu0 0.0
    %815 = vmatmul.mubr.f32.gmra.mrb[0].mxu0 %v67
    %v816 = vpop.f32.mrb[0].mxu0
    %v817 = vadd.f32 %v663, %v816
    %v818 = vpop.f32.mrb[0].mxu0
    %v819 = vadd.f32 %v665, %v818
    %820 = vmatprep.mubr.f32.mxu0 0.0
    %821 = vmatmul.mubr.f32.gmra.mrb[0].mxu0 %v68
    %v822 = vpop.f32.mrb[0].mxu0
    %v823 = vadd.f32 %v669, %v822
    %v824 = vpop.f32.mrb[0].mxu0
    %v825 = vadd.f32 %v671, %v824
    %826 = vdwg.mxu0
    %828 = vset.pattern.permute.xlu0 0
    %829 = vperm.xlu0 %828, %v63
    %v830 = vpop.permute.xlu0 %829
    %833 = vset.pattern.permute.xlu0 0
    %834 = vperm.xlu0 %833, %v64
    %v835 = vpop.permute.xlu0 %834
    %v837 = vadd.f32 %v740, %v830
    %v838 = vadd.f32 %v742, %v830
    %v839 = vadd.f32 %v817, %v830
    %v840 = vadd.f32 %v819, %v830
    %v841 = vadd.f32 %v746, %v835
    %v842 = vadd.f32 %v748, %v835
    %v843 = vadd.f32 %v823, %v835
    %v844 = vadd.f32 %v825, %v835
    %v845 = vtanh.pop %v837
    %v846 = vtanh.pop %v838
    %v847 = vtanh.pop %v839
    %v848 = vtanh.pop %v840
    %v849 = vtanh.pop %v841
    %v850 = vtanh.pop %v842
    %v851 = vtanh.pop %v843
    %v852 = vtanh.pop %v844
    %853 = vrot.lane.b32.xlu0 %v845, 17
    %v854 = vpop.permute.xlu0 %853
    %855 = vrot.lane.b32.xlu0 %v849, 17
    %v856 = vpop.permute.xlu0 %855
    %857 = vrot.lane.b32.xlu0 %v846, 17
    %v858 = vpop.permute.xlu0 %857
    %859 = vrot.lane.b32.xlu0 %v850, 17
    %v860 = vpop.permute.xlu0 %859
    %861 = vrot.lane.b32.xlu0 %v847, 17
    %v862 = vpop.permute.xlu0 %861
    %863 = vrot.lane.b32.xlu0 %v851, 17
    %v864 = vpop.permute.xlu0 %863
    %865 = vrot.lane.b32.xlu0 %v848, 17
    %v866 = vpop.permute.xlu0 %865
    %867 = vrot.lane.b32.xlu0 %v852, 17
    %v868 = vpop.permute.xlu0 %867
    %v869 = vsel %vm120, %v862, %v866
    %v870 = vsel %vm120, %v864, %v868
    %v871 = vsel %vm120, %v858, %v862
    %v872 = vsel %vm120, %v860, %v864
    %v873 = vsel %vm120, %v854, %v858
    %v874 = vsel %vm120, %v856, %v860
    %v875 = vsel %vm120, %v866, %v854
    %v876 = vsel %vm120, %v868, %v856
    %v877 = vsel %vm129, %v875, 0.0
    %v878 = vsel %vm130, %v873, 0.0
    %v879 = vsel %vm131, %v871, 0.0
    %v880 = vsel %vm132, %v869, 0.0
    %v881 = vsel %vm129, %v876, 0.0
    %v882 = vsel %vm130, %v874, 0.0
    %v883 = vsel %vm131, %v872, 0.0
    %v884 = vsel %vm132, %v870, 0.0
    %885 = vst [vmem:[#allocation2] sm:$0xff] %v877
    %886 = vst [vmem:[#allocation2 + $0x8] sm:$0xff] %v878
    %887 = vst [vmem:[#allocation2 + $0x10] sm:$0xff] %v879
    %888 = vst [vmem:[#allocation2 + $0x18] sm:$0xff] %v880
    %889 = vst [vmem:[#allocation2 + $0x20] sm:$0xff] %v881
    %890 = vst [vmem:[#allocation2 + $0x28] sm:$0xff] %v882
    %891 = vst [vmem:[#allocation2 + $0x30] sm:$0xff] %v883
    %892 = vst [vmem:[#allocation2 + $0x38] sm:$0xff] %v884
    %893 = vrot.lane.b32.xlu0 %v845, 16
    %v894 = vpop.permute.xlu0 %893
    %895 = vrot.lane.b32.xlu0 %v849, 16
    %v896 = vpop.permute.xlu0 %895
    %897 = vrot.lane.b32.xlu0 %v846, 16
    %v898 = vpop.permute.xlu0 %897
    %899 = vrot.lane.b32.xlu0 %v850, 16
    %v900 = vpop.permute.xlu0 %899
    %901 = vrot.lane.b32.xlu0 %v847, 16
    %v902 = vpop.permute.xlu0 %901
    %903 = vrot.lane.b32.xlu0 %v851, 16
    %v904 = vpop.permute.xlu0 %903
    %905 = vrot.lane.b32.xlu0 %v848, 16
    %v906 = vpop.permute.xlu0 %905
    %907 = vrot.lane.b32.xlu0 %v852, 16
    %v908 = vpop.permute.xlu0 %907
    %v909 = vsel %vm165, %v902, %v906
    %v910 = vsel %vm165, %v904, %v908
    %v911 = vsel %vm165, %v898, %v902
    %v912 = vsel %vm165, %v900, %v904
    %v913 = vsel %vm165, %v894, %v898
    %v914 = vsel %vm165, %v896, %v900
    %v915 = vsel %vm165, %v906, %v894
    %v916 = vsel %vm165, %v908, %v896
    %v917 = vsel %vm88, %v915, 0.0
    %v918 = vsel %vm89, %v913, 0.0
    %v919 = vsel %vm90, %v911, 0.0
    %v920 = vsel %vm91, %v909, 0.0
    %v921 = vsel %vm88, %v916, 0.0
    %v922 = vsel %vm89, %v914, 0.0
    %v923 = vsel %vm90, %v912, 0.0
    %v924 = vsel %vm91, %v910, 0.0
    %925 = vst [vmem:[#allocation2 + $0x40] sm:$0xff] %v917
    %926 = vst [vmem:[#allocation2 + $0x48] sm:$0xff] %v918
    %927 = vst [vmem:[#allocation2 + $0x50] sm:$0xff] %v919
    %928 = vst [vmem:[#allocation2 + $0x58] sm:$0xff] %v920
    %929 = vst [vmem:[#allocation2 + $0x60] sm:$0xff] %v921
    %930 = vst [vmem:[#allocation2 + $0x68] sm:$0xff] %v922
    %931 = vst [vmem:[#allocation2 + $0x70] sm:$0xff] %v923
    %932 = vst [vmem:[#allocation2 + $0x78] sm:$0xff] %v924
    %933 = vrot.lane.b32.xlu0 %v845, 15
    %v934 = vpop.permute.xlu0 %933
    %935 = vrot.lane.b32.xlu0 %v849, 15
    %v936 = vpop.permute.xlu0 %935
    %937 = vrot.lane.b32.xlu0 %v846, 15
    %v938 = vpop.permute.xlu0 %937
    %939 = vrot.lane.b32.xlu0 %v850, 15
    %v940 = vpop.permute.xlu0 %939
    %941 = vrot.lane.b32.xlu0 %v847, 15
    %v942 = vpop.permute.xlu0 %941
    %943 = vrot.lane.b32.xlu0 %v851, 15
    %v944 = vpop.permute.xlu0 %943
    %945 = vrot.lane.b32.xlu0 %v848, 15
    %v946 = vpop.permute.xlu0 %945
    %947 = vrot.lane.b32.xlu0 %v852, 15
    %v948 = vpop.permute.xlu0 %947
    %v949 = vsel %vm206, %v942, %v946
    %v950 = vsel %vm206, %v944, %v948
    %v951 = vsel %vm206, %v938, %v942
    %v952 = vsel %vm206, %v940, %v944
    %v953 = vsel %vm206, %v934, %v938
    %v954 = vsel %vm206, %v936, %v940
    %v955 = vsel %vm206, %v946, %v934
    %v956 = vsel %vm206, %v948, %v936
    %v957 = vsel %vm215, %v955, 0.0
    %v958 = vsel %vm216, %v953, 0.0
    %v959 = vsel %vm217, %v951, 0.0
    %v960 = vsel %vm218, %v949, 0.0
    %v961 = vsel %vm215, %v956, 0.0
    %v962 = vsel %vm216, %v954, 0.0
    %v963 = vsel %vm217, %v952, 0.0
    %v964 = vsel %vm218, %v950, 0.0
    %965 = vst [vmem:[#allocation2 + $0x80] sm:$0xff] %v957
    %966 = vst [vmem:[#allocation2 + $0x88] sm:$0xff] %v958
    %967 = vst [vmem:[#allocation2 + $0x90] sm:$0xff] %v959
    %968 = vst [vmem:[#allocation2 + $0x98] sm:$0xff] %v960
    %969 = vst [vmem:[#allocation2 + $0xa0] sm:$0xff] %v961
    %970 = vst [vmem:[#allocation2 + $0xa8] sm:$0xff] %v962
    %971 = vst [vmem:[#allocation2 + $0xb0] sm:$0xff] %v963
    %972 = vst [vmem:[#allocation2 + $0xb8] sm:$0xff] %v964
    %973 = vrot.lane.b32.xlu0 %v845, 1
    %v974 = vpop.permute.xlu0 %973
    %975 = vrot.lane.b32.xlu0 %v849, 1
    %v976 = vpop.permute.xlu0 %975
    %977 = vrot.lane.b32.xlu0 %v846, 1
    %v978 = vpop.permute.xlu0 %977
    %979 = vrot.lane.b32.xlu0 %v850, 1
    %v980 = vpop.permute.xlu0 %979
    %981 = vrot.lane.b32.xlu0 %v847, 1
    %v982 = vpop.permute.xlu0 %981
    %983 = vrot.lane.b32.xlu0 %v851, 1
    %v984 = vpop.permute.xlu0 %983
    %985 = vrot.lane.b32.xlu0 %v848, 1
    %v986 = vpop.permute.xlu0 %985
    %987 = vrot.lane.b32.xlu0 %v852, 1
    %v988 = vpop.permute.xlu0 %987
    %v989 = vsel %vm251, %v982, %v986
    %v990 = vsel %vm251, %v984, %v988
    %v991 = vsel %vm251, %v978, %v982
    %v992 = vsel %vm251, %v980, %v984
    %v993 = vsel %vm251, %v974, %v978
    %v994 = vsel %vm251, %v976, %v980
    %v995 = vsel %vm251, %v986, %v974
    %v996 = vsel %vm251, %v988, %v976
    %v997 = vsel %vm96, %v995, 0.0
    %v998 = vsel %vm97, %v993, 0.0
    %v999 = vsel %vm98, %v991, 0.0
    %v1000 = vsel %vm99, %v989, 0.0
    %v1001 = vsel %vm96, %v996, 0.0
    %v1002 = vsel %vm97, %v994, 0.0
    %v1003 = vsel %vm98, %v992, 0.0
    %v1004 = vsel %vm99, %v990, 0.0
    %1005 = vst [vmem:[#allocation2 + $0xc0] sm:$0xff] %v997
    %1006 = vst [vmem:[#allocation2 + $0xc8] sm:$0xff] %v998
    %1007 = vst [vmem:[#allocation2 + $0xd0] sm:$0xff] %v999
    %1008 = vst [vmem:[#allocation2 + $0xd8] sm:$0xff] %v1000
    %1009 = vst [vmem:[#allocation2 + $0xe0] sm:$0xff] %v1001
    %1010 = vst [vmem:[#allocation2 + $0xe8] sm:$0xff] %v1002
    %1011 = vst [vmem:[#allocation2 + $0xf0] sm:$0xff] %v1003
    %1012 = vst [vmem:[#allocation2 + $0xf8] sm:$0xff] %v1004
    %1013 = vst [vmem:[#allocation2 + $0x100] sm:$0xff] %v845
    %1014 = vst [vmem:[#allocation2 + $0x108] sm:$0xff] %v846
    %1015 = vst [vmem:[#allocation2 + $0x110] sm:$0xff] %v847
    %1016 = vst [vmem:[#allocation2 + $0x118] sm:$0xff] %v848
    %1017 = vst [vmem:[#allocation2 + $0x120] sm:$0xff] %v849
    %1018 = vst [vmem:[#allocation2 + $0x128] sm:$0xff] %v850
    %1019 = vst [vmem:[#allocation2 + $0x130] sm:$0xff] %v851
    %1020 = vst [vmem:[#allocation2 + $0x138] sm:$0xff] %v852
    %1021 = vrot.lane.b32.xlu0 %v845, 127
    %v1022 = vpop.permute.xlu0 %1021
    %1023 = vrot.lane.b32.xlu0 %v849, 127
    %v1024 = vpop.permute.xlu0 %1023
    %1025 = vrot.lane.b32.xlu0 %v846, 127
    %v1026 = vpop.permute.xlu0 %1025
    %1027 = vrot.lane.b32.xlu0 %v850, 127
    %v1028 = vpop.permute.xlu0 %1027
    %1029 = vrot.lane.b32.xlu0 %v847, 127
    %v1030 = vpop.permute.xlu0 %1029
    %1031 = vrot.lane.b32.xlu0 %v851, 127
    %v1032 = vpop.permute.xlu0 %1031
    %1033 = vrot.lane.b32.xlu0 %v848, 127
    %v1034 = vpop.permute.xlu0 %1033
    %1035 = vrot.lane.b32.xlu0 %v852, 127
    %v1036 = vpop.permute.xlu0 %1035
    %v1037 = vsel %vm300, %v1030, %v1034
    %v1038 = vsel %vm300, %v1032, %v1036
    %v1039 = vsel %vm300, %v1026, %v1030
    %v1040 = vsel %vm300, %v1028, %v1032
    %v1041 = vsel %vm300, %v1022, %v1026
    %v1042 = vsel %vm300, %v1024, %v1028
    %v1043 = vsel %vm300, %v1034, %v1022
    %v1044 = vsel %vm300, %v1036, %v1024
    %v1045 = vsel %vm100, %v1041, 0.0
    %v1046 = vsel %vm101, %v1039, 0.0
    %v1047 = vsel %vm102, %v1037, 0.0
    %v1048 = vsel %vm103, %v1043, 0.0
    %v1049 = vsel %vm100, %v1042, 0.0
    %v1050 = vsel %vm101, %v1040, 0.0
    %v1051 = vsel %vm102, %v1038, 0.0
    %v1052 = vsel %vm103, %v1044, 0.0
    %1053 = vst [vmem:[#allocation2 + $0x140] sm:$0xff] %v1045
    %1054 = vst [vmem:[#allocation2 + $0x148] sm:$0xff] %v1046
    %1055 = vst [vmem:[#allocation2 + $0x150] sm:$0xff] %v1047
    %1056 = vst [vmem:[#allocation2 + $0x158] sm:$0xff] %v1048
    %1057 = vst [vmem:[#allocation2 + $0x160] sm:$0xff] %v1049
    %1058 = vst [vmem:[#allocation2 + $0x168] sm:$0xff] %v1050
    %1059 = vst [vmem:[#allocation2 + $0x170] sm:$0xff] %v1051
    %1060 = vst [vmem:[#allocation2 + $0x178] sm:$0xff] %v1052
    %1061 = vrot.lane.b32.xlu0 %v845, 113
    %v1062 = vpop.permute.xlu0 %1061
    %1063 = vrot.lane.b32.xlu0 %v849, 113
    %v1064 = vpop.permute.xlu0 %1063
    %1065 = vrot.lane.b32.xlu0 %v846, 113
    %v1066 = vpop.permute.xlu0 %1065
    %1067 = vrot.lane.b32.xlu0 %v850, 113
    %v1068 = vpop.permute.xlu0 %1067
    %1069 = vrot.lane.b32.xlu0 %v847, 113
    %v1070 = vpop.permute.xlu0 %1069
    %1071 = vrot.lane.b32.xlu0 %v851, 113
    %v1072 = vpop.permute.xlu0 %1071
    %1073 = vrot.lane.b32.xlu0 %v848, 113
    %v1074 = vpop.permute.xlu0 %1073
    %1075 = vrot.lane.b32.xlu0 %v852, 113
    %v1076 = vpop.permute.xlu0 %1075
    %v1077 = vsel %vm341, %v1070, %v1074
    %v1078 = vsel %vm341, %v1072, %v1076
    %v1079 = vsel %vm341, %v1066, %v1070
    %v1080 = vsel %vm341, %v1068, %v1072
    %v1081 = vsel %vm341, %v1062, %v1066
    %v1082 = vsel %vm341, %v1064, %v1068
    %v1083 = vsel %vm341, %v1074, %v1062
    %v1084 = vsel %vm341, %v1076, %v1064
    %v1085 = vsel %vm350, %v1081, 0.0
    %v1086 = vsel %vm351, %v1079, 0.0
    %v1087 = vsel %vm352, %v1077, 0.0
    %v1088 = vsel %vm353, %v1083, 0.0
    %v1089 = vsel %vm350, %v1082, 0.0
    %v1090 = vsel %vm351, %v1080, 0.0
    %v1091 = vsel %vm352, %v1078, 0.0
    %v1092 = vsel %vm353, %v1084, 0.0
    %1093 = vst [vmem:[#allocation2 + $0x180] sm:$0xff] %v1085
    %1094 = vst [vmem:[#allocation2 + $0x188] sm:$0xff] %v1086
    %1095 = vst [vmem:[#allocation2 + $0x190] sm:$0xff] %v1087
    %1096 = vst [vmem:[#allocation2 + $0x198] sm:$0xff] %v1088
    %1097 = vst [vmem:[#allocation2 + $0x1a0] sm:$0xff] %v1089
    %1098 = vst [vmem:[#allocation2 + $0x1a8] sm:$0xff] %v1090
    %1099 = vst [vmem:[#allocation2 + $0x1b0] sm:$0xff] %v1091
    %1100 = vst [vmem:[#allocation2 + $0x1b8] sm:$0xff] %v1092
    %1101 = vrot.lane.b32.xlu0 %v845, 112
    %v1102 = vpop.permute.xlu0 %1101
    %1103 = vrot.lane.b32.xlu0 %v849, 112
    %v1104 = vpop.permute.xlu0 %1103
    %1105 = vrot.lane.b32.xlu0 %v846, 112
    %v1106 = vpop.permute.xlu0 %1105
    %1107 = vrot.lane.b32.xlu0 %v850, 112
    %v1108 = vpop.permute.xlu0 %1107
    %1109 = vrot.lane.b32.xlu0 %v847, 112
    %v1110 = vpop.permute.xlu0 %1109
    %1111 = vrot.lane.b32.xlu0 %v851, 112
    %v1112 = vpop.permute.xlu0 %1111
    %1113 = vrot.lane.b32.xlu0 %v848, 112
    %v1114 = vpop.permute.xlu0 %1113
    %1115 = vrot.lane.b32.xlu0 %v852, 112
    %v1116 = vpop.permute.xlu0 %1115
    %v1117 = vsel %vm386, %v1110, %v1114
    %v1118 = vsel %vm386, %v1112, %v1116
    %v1119 = vsel %vm386, %v1106, %v1110
    %v1120 = vsel %vm386, %v1108, %v1112
    %v1121 = vsel %vm386, %v1102, %v1106
    %v1122 = vsel %vm386, %v1104, %v1108
    %v1123 = vsel %vm386, %v1114, %v1102
    %v1124 = vsel %vm386, %v1116, %v1104
    %v1125 = vsel %vm92, %v1121, 0.0
    %v1126 = vsel %vm93, %v1119, 0.0
    %v1127 = vsel %vm94, %v1117, 0.0
    %v1128 = vsel %vm95, %v1123, 0.0
    %v1129 = vsel %vm92, %v1122, 0.0
    %v1130 = vsel %vm93, %v1120, 0.0
    %v1131 = vsel %vm94, %v1118, 0.0
    %v1132 = vsel %vm95, %v1124, 0.0
    %1133 = vst [vmem:[#allocation2 + $0x1c0] sm:$0xff] %v1125
    %1134 = vst [vmem:[#allocation2 + $0x1c8] sm:$0xff] %v1126
    %1135 = vst [vmem:[#allocation2 + $0x1d0] sm:$0xff] %v1127
    %1136 = vst [vmem:[#allocation2 + $0x1d8] sm:$0xff] %v1128
    %1137 = vst [vmem:[#allocation2 + $0x1e0] sm:$0xff] %v1129
    %1138 = vst [vmem:[#allocation2 + $0x1e8] sm:$0xff] %v1130
    %1139 = vst [vmem:[#allocation2 + $0x1f0] sm:$0xff] %v1131
    %1140 = vst [vmem:[#allocation2 + $0x1f8] sm:$0xff] %v1132
    %v1141 = vld [vmem:[#allocation2] sm:$0xff]
    %v1142 = vld [vmem:[#allocation2 + $0x8] sm:$0xff]
    %v1143 = vld [vmem:[#allocation2 + $0x10] sm:$0xff]
    %v1144 = vld [vmem:[#allocation2 + $0x18] sm:$0xff]
    %v1145 = vld [vmem:[#allocation2 + $0x20] sm:$0xff]
    %v1146 = vld [vmem:[#allocation2 + $0x28] sm:$0xff]
    %v1147 = vld [vmem:[#allocation2 + $0x30] sm:$0xff]
    %v1148 = vld [vmem:[#allocation2 + $0x38] sm:$0xff]
    %v1149 = vld [vmem:[#allocation2 + $0x40] sm:$0xff]
    %v1150 = vld [vmem:[#allocation2 + $0x48] sm:$0xff]
    %v1151 = vld [vmem:[#allocation2 + $0x50] sm:$0xff]
    %v1152 = vld [vmem:[#allocation2 + $0x58] sm:$0xff]
    %v1153 = vld [vmem:[#allocation2 + $0x60] sm:$0xff]
    %v1154 = vld [vmem:[#allocation2 + $0x68] sm:$0xff]
    %v1155 = vld [vmem:[#allocation2 + $0x70] sm:$0xff]
    %v1156 = vld [vmem:[#allocation2 + $0x78] sm:$0xff]
    %v1157 = vld [vmem:[#allocation2 + $0x80] sm:$0xff]
    %v1158 = vld [vmem:[#allocation2 + $0x88] sm:$0xff]
    %v1159 = vld [vmem:[#allocation2 + $0x90] sm:$0xff]
    %v1160 = vld [vmem:[#allocation2 + $0x98] sm:$0xff]
    %v1161 = vld [vmem:[#allocation2 + $0xa0] sm:$0xff]
    %v1162 = vld [vmem:[#allocation2 + $0xa8] sm:$0xff]
    %v1163 = vld [vmem:[#allocation2 + $0xb0] sm:$0xff]
    %v1164 = vld [vmem:[#allocation2 + $0xb8] sm:$0xff]
    %v1165 = vld [vmem:[#allocation2 + $0xc0] sm:$0xff]
    %v1166 = vld [vmem:[#allocation2 + $0xc8] sm:$0xff]
    %v1167 = vld [vmem:[#allocation2 + $0xd0] sm:$0xff]
    %v1168 = vld [vmem:[#allocation2 + $0xd8] sm:$0xff]
    %v1169 = vld [vmem:[#allocation2 + $0xe0] sm:$0xff]
    %v1170 = vld [vmem:[#allocation2 + $0xe8] sm:$0xff]
    %v1171 = vld [vmem:[#allocation2 + $0xf0] sm:$0xff]
    %v1172 = vld [vmem:[#allocation2 + $0xf8] sm:$0xff]
    %v1173 = vld [vmem:[#allocation2 + $0x100] sm:$0xff]
    %v1174 = vld [vmem:[#allocation2 + $0x108] sm:$0xff]
    %v1175 = vld [vmem:[#allocation2 + $0x110] sm:$0xff]
    %v1176 = vld [vmem:[#allocation2 + $0x118] sm:$0xff]
    %v1177 = vld [vmem:[#allocation2 + $0x120] sm:$0xff]
    %v1178 = vld [vmem:[#allocation2 + $0x128] sm:$0xff]
    %v1179 = vld [vmem:[#allocation2 + $0x130] sm:$0xff]
    %v1180 = vld [vmem:[#allocation2 + $0x138] sm:$0xff]
    %v1181 = vld [vmem:[#allocation2 + $0x140] sm:$0xff]
    %v1182 = vld [vmem:[#allocation2 + $0x148] sm:$0xff]
    %v1183 = vld [vmem:[#allocation2 + $0x150] sm:$0xff]
    %v1184 = vld [vmem:[#allocation2 + $0x158] sm:$0xff]
    %v1185 = vld [vmem:[#allocation2 + $0x160] sm:$0xff]
    %v1186 = vld [vmem:[#allocation2 + $0x168] sm:$0xff]
    %v1187 = vld [vmem:[#allocation2 + $0x170] sm:$0xff]
    %v1188 = vld [vmem:[#allocation2 + $0x178] sm:$0xff]
    %v1189 = vld [vmem:[#allocation2 + $0x180] sm:$0xff]
    %v1190 = vld [vmem:[#allocation2 + $0x188] sm:$0xff]
    %v1191 = vld [vmem:[#allocation2 + $0x190] sm:$0xff]
    %v1192 = vld [vmem:[#allocation2 + $0x198] sm:$0xff]
    %v1193 = vld [vmem:[#allocation2 + $0x1a0] sm:$0xff]
    %v1194 = vld [vmem:[#allocation2 + $0x1a8] sm:$0xff]
    %v1195 = vld [vmem:[#allocation2 + $0x1b0] sm:$0xff]
    %v1196 = vld [vmem:[#allocation2 + $0x1b8] sm:$0xff]
    %v1197 = vld [vmem:[#allocation2 + $0x1c0] sm:$0xff]
    %v1198 = vld [vmem:[#allocation2 + $0x1c8] sm:$0xff]
    %v1199 = vld [vmem:[#allocation2 + $0x1d0] sm:$0xff]
    %v1200 = vld [vmem:[#allocation2 + $0x1d8] sm:$0xff]
    %v1201 = vld [vmem:[#allocation2 + $0x1e0] sm:$0xff]
    %v1202 = vld [vmem:[#allocation2 + $0x1e8] sm:$0xff]
    %v1203 = vld [vmem:[#allocation2 + $0x1f0] sm:$0xff]
    %v1204 = vld [vmem:[#allocation2 + $0x1f8] sm:$0xff]
    %1205 = vrot.lane.b32.xlu0 %v845, 111
    %v1206 = vpop.permute.xlu0 %1205
    %1207 = vrot.lane.b32.xlu0 %v849, 111
    %v1208 = vpop.permute.xlu0 %1207
    %1209 = vrot.lane.b32.xlu0 %v846, 111
    %v1210 = vpop.permute.xlu0 %1209
    %1211 = vrot.lane.b32.xlu0 %v850, 111
    %v1212 = vpop.permute.xlu0 %1211
    %1213 = vrot.lane.b32.xlu0 %v847, 111
    %v1214 = vpop.permute.xlu0 %1213
    %1215 = vrot.lane.b32.xlu0 %v851, 111
    %v1216 = vpop.permute.xlu0 %1215
    %1217 = vrot.lane.b32.xlu0 %v848, 111
    %v1218 = vpop.permute.xlu0 %1217
    %1219 = vrot.lane.b32.xlu0 %v852, 111
    %v1220 = vpop.permute.xlu0 %1219
    %v1221 = vsel %vm491, %v1214, %v1218
    %v1222 = vsel %vm491, %v1216, %v1220
    %v1223 = vsel %vm491, %v1210, %v1214
    %v1224 = vsel %vm491, %v1212, %v1216
    %v1225 = vsel %vm491, %v1206, %v1210
    %v1226 = vsel %vm491, %v1208, %v1212
    %v1227 = vsel %vm491, %v1218, %v1206
    %v1228 = vsel %vm491, %v1220, %v1208
    %v1229 = vsel %vm500, %v1225, 0.0
    %v1230 = vsel %vm501, %v1223, 0.0
    %v1231 = vsel %vm502, %v1221, 0.0
    %v1232 = vsel %vm503, %v1227, 0.0
    %v1233 = vsel %vm500, %v1226, 0.0
    %v1234 = vsel %vm501, %v1224, 0.0
    %v1235 = vsel %vm502, %v1222, 0.0
    %v1236 = vsel %vm503, %v1228, 0.0
    %1237 = vmatprep.subr.mxu0 %v1230
    %1238 = vmatpush1.msra.mxu0 %v1229
    %1239 = vmatprep.subr.mxu0 %v1234
    %1240 = vmatpush1.msra.mxu0 %v1233
    %1241 = vmatprep.subr.mxu0 0.0
    %1242 = vmatpush1.msra.mxu0 0.0
    %1243 = vmatprep.subr.mxu0 0.0
    %1244 = vmatpush1.msra.mxu0 0.0
    %1245 = vmatprep.subr.mxu0 0.0
    %1246 = vmatpush1.msra.mxu0 0.0
    %1247 = vmatprep.subr.mxu0 0.0
    %1248 = vmatpush1.msra.mxu0 0.0
    %1249 = vmatprep.subr.mxu0 0.0
    %1250 = vmatpush1.msra.mxu0 0.0
    %1251 = vmatprep.subr.mxu0 0.0
    %1252 = vmatpush1.msra.mxu0 0.0
    %1253 = vmatprep.subr.mxu0 0.0
    %1254 = vmatpush1.msra.mxu0 0.0
    %1255 = vmatprep.subr.mxu0 0.0
    %1256 = vmatpush1.msra.mxu0 0.0
    %1257 = vmatprep.subr.mxu0 0.0
    %1258 = vmatpush1.msra.mxu0 0.0
    %1259 = vmatprep.subr.mxu0 0.0
    %1260 = vmatpush1.msra.mxu0 0.0
    %1261 = vmatprep.subr.mxu0 0.0
    %1262 = vmatpush1.msra.mxu0 0.0
    %1263 = vmatprep.subr.mxu0 0.0
    %1264 = vmatpush1.msra.mxu0 0.0
    %1265 = vmatprep.subr.mxu0 0.0
    %1266 = vmatpush1.msra.mxu0 0.0
    %1267 = vmatprep.subr.mxu0 0.0
    %1268 = vmatpush1.msra.mxu0 0.0
    %1269 = vmatprep.subr.mxu0 0.0
    %1270 = vmatpush1.msra.mxu0 0.0
    %1271 = vmatprep.subr.mxu0 0.0
    %1272 = vmatpush1.msra.mxu0 0.0
    %1273 = vmatprep.subr.mxu0 0.0
    %1274 = vmatpush1.msra.mxu0 0.0
    %1275 = vmatprep.subr.mxu0 0.0
    %1276 = vmatpush1.msra.mxu0 0.0
    %1277 = vmatprep.subr.mxu0 0.0
    %1278 = vmatpush1.msra.mxu0 0.0
    %1279 = vmatprep.subr.mxu0 0.0
    %1280 = vmatpush1.msra.mxu0 0.0
    %1281 = vmatprep.subr.mxu0 0.0
    %1282 = vmatpush1.msra.mxu0 0.0
    %1283 = vmatprep.subr.mxu0 0.0
    %1284 = vmatpush1.msra.mxu0 0.0
    %1285 = vmatprep.subr.mxu0 0.0
    %1286 = vmatpush1.msra.mxu0 0.0
    %1287 = vmatprep.subr.mxu0 0.0
    %1288 = vmatpush1.msra.mxu0 0.0
    %1289 = vmatprep.subr.mxu0 0.0
    %1290 = vmatpush1.msra.mxu0 0.0
    %1291 = vmatprep.subr.mxu0 0.0
    %1292 = vmatpush1.msra.mxu0 0.0
    %1293 = vmatprep.subr.mxu0 0.0
    %1294 = vmatpush1.msra.mxu0 0.0
    %1295 = vmatprep.subr.mxu0 0.0
    %1296 = vmatpush1.msra.mxu0 0.0
    %1297 = vmatprep.subr.mxu0 0.0
    %1298 = vmatpush1.msra.mxu0 0.0
    %1299 = vmatprep.subr.mxu0 0.0
    %1300 = vmatpush1.msra.mxu0 0.0
    %1301 = vmatprep.mubr.f32.mxu0 0.0
    %1302 = vmatmul.mubr.f32.gmra.mrb[0].mxu0 %v514
    %v1303 = vpop.f32.mrb[0].mxu0
    %v1304 = vadd.f32 0.0, %v1303
    %v1305 = vpop.f32.mrb[0].mxu0
    %v1306 = vadd.f32 0.0, %v1305
    %1307 = vmatprep.mubr.f32.mxu0 0.0
    %1308 = vmatmul.mubr.f32.gmra.mrb[0].mxu0 %v517
    %v1309 = vpop.f32.mrb[0].mxu0
    %v1310 = vadd.f32 0.0, %v1309
    %v1311 = vpop.f32.mrb[0].mxu0
    %v1312 = vadd.f32 0.0, %v1311
    %1313 = vdwg.mxu0
    %1314 = vmatprep.subr.mxu0 %v1232
    %1315 = vmatpush1.msra.mxu0 %v1231
    %1316 = vmatprep.subr.mxu0 %v1236
    %1317 = vmatpush1.msra.mxu0 %v1235
    %1318 = vmatprep.subr.mxu0 0.0
    %1319 = vmatpush1.msra.mxu0 0.0
    %1320 = vmatprep.subr.mxu0 0.0
    %1321 = vmatpush1.msra.mxu0 0.0
    %1322 = vmatprep.subr.mxu0 0.0
    %1323 = vmatpush1.msra.mxu0 0.0
    %1324 = vmatprep.subr.mxu0 0.0
    %1325 = vmatpush1.msra.mxu0 0.0
    %1326 = vmatprep.subr.mxu0 0.0
    %1327 = vmatpush1.msra.mxu0 0.0
    %1328 = vmatprep.subr.mxu0 0.0
    %1329 = vmatpush1.msra.mxu0 0.0
    %1330 = vmatprep.subr.mxu0 0.0
    %1331 = vmatpush1.msra.mxu0 0.0
    %1332 = vmatprep.subr.mxu0 0.0
    %1333 = vmatpush1.msra.mxu0 0.0
    %1334 = vmatprep.subr.mxu0 0.0
    %1335 = vmatpush1.msra.mxu0 0.0
    %1336 = vmatprep.subr.mxu0 0.0
    %1337 = vmatpush1.msra.mxu0 0.0
    %1338 = vmatprep.subr.mxu0 0.0
    %1339 = vmatpush1.msra.mxu0 0.0
    %1340 = vmatprep.subr.mxu0 0.0
    %1341 = vmatpush1.msra.mxu0 0.0
    %1342 = vmatprep.subr.mxu0 0.0
    %1343 = vmatpush1.msra.mxu0 0.0
    %1344 = vmatprep.subr.mxu0 0.0
    %1345 = vmatpush1.msra.mxu0 0.0
    %1346 = vmatprep.subr.mxu0 0.0
    %1347 = vmatpush1.msra.mxu0 0.0
    %1348 = vmatprep.subr.mxu0 0.0
    %1349 = vmatpush1.msra.mxu0 0.0
    %1350 = vmatprep.subr.mxu0 0.0
    %1351 = vmatpush1.msra.mxu0 0.0
    %1352 = vmatprep.subr.mxu0 0.0
    %1353 = vmatpush1.msra.mxu0 0.0
    %1354 = vmatprep.subr.mxu0 0.0
    %1355 = vmatpush1.msra.mxu0 0.0
    %1356 = vmatprep.subr.mxu0 0.0
    %1357 = vmatpush1.msra.mxu0 0.0
    %1358 = vmatprep.subr.mxu0 0.0
    %1359 = vmatpush1.msra.mxu0 0.0
    %1360 = vmatprep.subr.mxu0 0.0
    %1361 = vmatpush1.msra.mxu0 0.0
    %1362 = vmatprep.subr.mxu0 0.0
    %1363 = vmatpush1.msra.mxu0 0.0
    %1364 = vmatprep.subr.mxu0 0.0
    %1365 = vmatpush1.msra.mxu0 0.0
    %1366 = vmatprep.subr.mxu0 0.0
    %1367 = vmatpush1.msra.mxu0 0.0
    %1368 = vmatprep.subr.mxu0 0.0
    %1369 = vmatpush1.msra.mxu0 0.0
    %1370 = vmatprep.subr.mxu0 0.0
    %1371 = vmatpush1.msra.mxu0 0.0
    %1372 = vmatprep.subr.mxu0 0.0
    %1373 = vmatpush1.msra.mxu0 0.0
    %1374 = vmatprep.subr.mxu0 0.0
    %1375 = vmatpush1.msra.mxu0 0.0
    %1376 = vmatprep.subr.mxu0 0.0
    %1377 = vmatpush1.msra.mxu0 0.0
    %1378 = vmatprep.mubr.f32.mxu0 0.0
    %1379 = vmatmul.mubr.f32.gmra.mrb[0].mxu0 %v514
    %v1380 = vpop.f32.mrb[0].mxu0
    %v1381 = vadd.f32 0.0, %v1380
    %v1382 = vpop.f32.mrb[0].mxu0
    %v1383 = vadd.f32 0.0, %v1382
    %1384 = vmatprep.mubr.f32.mxu0 0.0
    %1385 = vmatmul.mubr.f32.gmra.mrb[0].mxu0 %v517
    %v1386 = vpop.f32.mrb[0].mxu0
    %v1387 = vadd.f32 0.0, %v1386
    %v1388 = vpop.f32.mrb[0].mxu0
    %v1389 = vadd.f32 0.0, %v1388
    %1390 = vdwg.mxu0
    %1391 = vmatprep.subr.mxu0 %v1142
    %1392 = vmatpush1.msra.mxu0 %v1141
    %1393 = vmatprep.subr.mxu0 %v1146
    %1394 = vmatpush1.msra.mxu0 %v1145
    %1395 = vmatprep.subr.mxu0 %v1150
    %1396 = vmatpush1.msra.mxu0 %v1149
    %1397 = vmatprep.subr.mxu0 %v1154
    %1398 = vmatpush1.msra.mxu0 %v1153
    %1399 = vmatprep.subr.mxu0 %v1158
    %1400 = vmatpush1.msra.mxu0 %v1157
    %1401 = vmatprep.subr.mxu0 %v1162
    %1402 = vmatpush1.msra.mxu0 %v1161
    %1403 = vmatprep.subr.mxu0 %v1166
    %1404 = vmatpush1.msra.mxu0 %v1165
    %1405 = vmatprep.subr.mxu0 %v1170
    %1406 = vmatpush1.msra.mxu0 %v1169
    %1407 = vmatprep.subr.mxu0 %v1174
    %1408 = vmatpush1.msra.mxu0 %v1173
    %1409 = vmatprep.subr.mxu0 %v1178
    %1410 = vmatpush1.msra.mxu0 %v1177
    %1411 = vmatprep.subr.mxu0 %v1182
    %1412 = vmatpush1.msra.mxu0 %v1181
    %1413 = vmatprep.subr.mxu0 %v1186
    %1414 = vmatpush1.msra.mxu0 %v1185
    %1415 = vmatprep.subr.mxu0 %v1190
    %1416 = vmatpush1.msra.mxu0 %v1189
    %1417 = vmatprep.subr.mxu0 %v1194
    %1418 = vmatpush1.msra.mxu0 %v1193
    %1419 = vmatprep.subr.mxu0 %v1198
    %1420 = vmatpush1.msra.mxu0 %v1197
    %1421 = vmatprep.subr.mxu0 %v1202
    %1422 = vmatpush1.msra.mxu0 %v1201
    %1423 = vmatprep.subr.mxu0 0.0
    %1424 = vmatpush1.msra.mxu0 0.0
    %1425 = vmatprep.subr.mxu0 0.0
    %1426 = vmatpush1.msra.mxu0 0.0
    %1427 = vmatprep.subr.mxu0 0.0
    %1428 = vmatpush1.msra.mxu0 0.0
    %1429 = vmatprep.subr.mxu0 0.0
    %1430 = vmatpush1.msra.mxu0 0.0
    %1431 = vmatprep.subr.mxu0 0.0
    %1432 = vmatpush1.msra.mxu0 0.0
    %1433 = vmatprep.subr.mxu0 0.0
    %1434 = vmatpush1.msra.mxu0 0.0
    %1435 = vmatprep.subr.mxu0 0.0
    %1436 = vmatpush1.msra.mxu0 0.0
    %1437 = vmatprep.subr.mxu0 0.0
    %1438 = vmatpush1.msra.mxu0 0.0
    %1439 = vmatprep.subr.mxu0 0.0
    %1440 = vmatpush1.msra.mxu0 0.0
    %1441 = vmatprep.subr.mxu0 0.0
    %1442 = vmatpush1.msra.mxu0 0.0
    %1443 = vmatprep.subr.mxu0 0.0
    %1444 = vmatpush1.msra.mxu0 0.0
    %1445 = vmatprep.subr.mxu0 0.0
    %1446 = vmatpush1.msra.mxu0 0.0
    %1447 = vmatprep.subr.mxu0 0.0
    %1448 = vmatpush1.msra.mxu0 0.0
    %1449 = vmatprep.subr.mxu0 0.0
    %1450 = vmatpush1.msra.mxu0 0.0
    %1451 = vmatprep.subr.mxu0 0.0
    %1452 = vmatpush1.msra.mxu0 0.0
    %1453 = vmatprep.subr.mxu0 0.0
    %1454 = vmatpush1.msra.mxu0 0.0
    %1455 = vmatprep.mubr.f32.mxu0 0.0
    %1456 = vmatmul.mubr.f32.gmra.mrb[0].mxu0 %v67
    %v1457 = vpop.f32.mrb[0].mxu0
    %v1458 = vadd.f32 %v1304, %v1457
    %v1459 = vpop.f32.mrb[0].mxu0
    %v1460 = vadd.f32 %v1306, %v1459
    %1461 = vmatprep.mubr.f32.mxu0 0.0
    %1462 = vmatmul.mubr.f32.gmra.mrb[0].mxu0 %v68
    %v1463 = vpop.f32.mrb[0].mxu0
    %v1464 = vadd.f32 %v1310, %v1463
    %v1465 = vpop.f32.mrb[0].mxu0
    %v1466 = vadd.f32 %v1312, %v1465
    %1467 = vdwg.mxu0
    %1468 = vmatprep.subr.mxu0 %v1144
    %1469 = vmatpush1.msra.mxu0 %v1143
    %1470 = vmatprep.subr.mxu0 %v1148
    %1471 = vmatpush1.msra.mxu0 %v1147
    %1472 = vmatprep.subr.mxu0 %v1152
    %1473 = vmatpush1.msra.mxu0 %v1151
    %1474 = vmatprep.subr.mxu0 %v1156
    %1475 = vmatpush1.msra.mxu0 %v1155
    %1476 = vmatprep.subr.mxu0 %v1160
    %1477 = vmatpush1.msra.mxu0 %v1159
    %1478 = vmatprep.subr.mxu0 %v1164
    %1479 = vmatpush1.msra.mxu0 %v1163
    %1480 = vmatprep.subr.mxu0 %v1168
    %1481 = vmatpush1.msra.mxu0 %v1167
    %1482 = vmatprep.subr.mxu0 %v1172
    %1483 = vmatpush1.msra.mxu0 %v1171
    %1484 = vmatprep.subr.mxu0 %v1176
    %1485 = vmatpush1.msra.mxu0 %v1175
    %1486 = vmatprep.subr.mxu0 %v1180
    %1487 = vmatpush1.msra.mxu0 %v1179
    %1488 = vmatprep.subr.mxu0 %v1184
    %1489 = vmatpush1.msra.mxu0 %v1183
    %1490 = vmatprep.subr.mxu0 %v1188
    %1491 = vmatpush1.msra.mxu0 %v1187
    %1492 = vmatprep.subr.mxu0 %v1192
    %1493 = vmatpush1.msra.mxu0 %v1191
    %1494 = vmatprep.subr.mxu0 %v1196
    %1495 = vmatpush1.msra.mxu0 %v1195
    %1496 = vmatprep.subr.mxu0 %v1200
    %1497 = vmatpush1.msra.mxu0 %v1199
    %1498 = vmatprep.subr.mxu0 %v1204
    %1499 = vmatpush1.msra.mxu0 %v1203
    %1500 = vmatprep.subr.mxu0 0.0
    %1501 = vmatpush1.msra.mxu0 0.0
    %1502 = vmatprep.subr.mxu0 0.0
    %1503 = vmatpush1.msra.mxu0 0.0
    %1504 = vmatprep.subr.mxu0 0.0
    %1505 = vmatpush1.msra.mxu0 0.0
    %1506 = vmatprep.subr.mxu0 0.0
    %1507 = vmatpush1.msra.mxu0 0.0
    %1508 = vmatprep.subr.mxu0 0.0
    %1509 = vmatpush1.msra.mxu0 0.0
    %1510 = vmatprep.subr.mxu0 0.0
    %1511 = vmatpush1.msra.mxu0 0.0
    %1512 = vmatprep.subr.mxu0 0.0
    %1513 = vmatpush1.msra.mxu0 0.0
    %1514 = vmatprep.subr.mxu0 0.0
    %1515 = vmatpush1.msra.mxu0 0.0
    %1516 = vmatprep.subr.mxu0 0.0
    %1517 = vmatpush1.msra.mxu0 0.0
    %1518 = vmatprep.subr.mxu0 0.0
    %1519 = vmatpush1.msra.mxu0 0.0
    %1520 = vmatprep.subr.mxu0 0.0
    %1521 = vmatpush1.msra.mxu0 0.0
    %1522 = vmatprep.subr.mxu0 0.0
    %1523 = vmatpush1.msra.mxu0 0.0
    %1524 = vmatprep.subr.mxu0 0.0
    %1525 = vmatpush1.msra.mxu0 0.0
    %1526 = vmatprep.subr.mxu0 0.0
    %1527 = vmatpush1.msra.mxu0 0.0
    %1528 = vmatprep.subr.mxu0 0.0
    %1529 = vmatpush1.msra.mxu0 0.0
    %1530 = vmatprep.subr.mxu0 0.0
    %1531 = vmatpush1.msra.mxu0 0.0
    %1532 = vmatprep.mubr.f32.mxu0 0.0
    %1533 = vmatmul.mubr.f32.gmra.mrb[0].mxu0 %v67
    %v1534 = vpop.f32.mrb[0].mxu0
    %v1535 = vadd.f32 %v1381, %v1534
    %v1536 = vpop.f32.mrb[0].mxu0
    %v1537 = vadd.f32 %v1383, %v1536
    %1538 = vmatprep.mubr.f32.mxu0 0.0
    %1539 = vmatmul.mubr.f32.gmra.mrb[0].mxu0 %v68
    %v1540 = vpop.f32.mrb[0].mxu0
    %v1541 = vadd.f32 %v1387, %v1540
    %v1542 = vpop.f32.mrb[0].mxu0
    %v1543 = vadd.f32 %v1389, %v1542
    %1544 = vdwg.mxu0
    %v1545 = vadd.f32 %v1458, %v830
    %v1546 = vadd.f32 %v1460, %v830
    %v1547 = vadd.f32 %v1535, %v830
    %v1548 = vadd.f32 %v1537, %v830
    %v1549 = vadd.f32 %v1464, %v835
    %v1550 = vadd.f32 %v1466, %v835
    %v1551 = vadd.f32 %v1541, %v835
    %v1552 = vadd.f32 %v1543, %v835
    %v1553 = vtanh.pop %v1545
    %v1554 = vtanh.pop %v1546
    %v1555 = vtanh.pop %v1547
    %v1556 = vtanh.pop %v1548
    %v1557 = vtanh.pop %v1549
    %v1558 = vtanh.pop %v1550
    %v1559 = vtanh.pop %v1551
    %v1560 = vtanh.pop %v1552
    %1561 = vrot.lane.b32.xlu0 %v1553, 17
    %v1562 = vpop.permute.xlu0 %1561
    %1563 = vrot.lane.b32.xlu0 %v1557, 17
    %v1564 = vpop.permute.xlu0 %1563
    %1565 = vrot.lane.b32.xlu0 %v1554, 17
    %v1566 = vpop.permute.xlu0 %1565
    %1567 = vrot.lane.b32.xlu0 %v1558, 17
    %v1568 = vpop.permute.xlu0 %1567
    %1569 = vrot.lane.b32.xlu0 %v1555, 17
    %v1570 = vpop.permute.xlu0 %1569
    %1571 = vrot.lane.b32.xlu0 %v1559, 17
    %v1572 = vpop.permute.xlu0 %1571
    %1573 = vrot.lane.b32.xlu0 %v1556, 17
    %v1574 = vpop.permute.xlu0 %1573
    %1575 = vrot.lane.b32.xlu0 %v1560, 17
    %v1576 = vpop.permute.xlu0 %1575
    %v1577 = vsel %vm120, %v1570, %v1574
    %v1578 = vsel %vm120, %v1572, %v1576
    %v1579 = vsel %vm120, %v1566, %v1570
    %v1580 = vsel %vm120, %v1568, %v1572
    %v1581 = vsel %vm120, %v1562, %v1566
    %v1582 = vsel %vm120, %v1564, %v1568
    %v1583 = vsel %vm120, %v1574, %v1562
    %v1584 = vsel %vm120, %v1576, %v1564
    %v1585 = vsel %vm129, %v1583, 0.0
    %v1586 = vsel %vm130, %v1581, 0.0
    %v1587 = vsel %vm131, %v1579, 0.0
    %v1588 = vsel %vm132, %v1577, 0.0
    %v1589 = vsel %vm129, %v1584, 0.0
    %v1590 = vsel %vm130, %v1582, 0.0
    %v1591 = vsel %vm131, %v1580, 0.0
    %v1592 = vsel %vm132, %v1578, 0.0
    %1593 = vst [vmem:[#allocation2] sm:$0xff] %v1585
    %1594 = vst [vmem:[#allocation2 + $0x8] sm:$0xff] %v1586
    %1595 = vst [vmem:[#allocation2 + $0x10] sm:$0xff] %v1587
    %1596 = vst [vmem:[#allocation2 + $0x18] sm:$0xff] %v1588
    %1597 = vst [vmem:[#allocation2 + $0x20] sm:$0xff] %v1589
    %1598 = vst [vmem:[#allocation2 + $0x28] sm:$0xff] %v1590
    %1599 = vst [vmem:[#allocation2 + $0x30] sm:$0xff] %v1591
    %1600 = vst [vmem:[#allocation2 + $0x38] sm:$0xff] %v1592
    %1601 = vrot.lane.b32.xlu0 %v1553, 16
    %v1602 = vpop.permute.xlu0 %1601
    %1603 = vrot.lane.b32.xlu0 %v1557, 16
    %v1604 = vpop.permute.xlu0 %1603
    %1605 = vrot.lane.b32.xlu0 %v1554, 16
    %v1606 = vpop.permute.xlu0 %1605
    %1607 = vrot.lane.b32.xlu0 %v1558, 16
    %v1608 = vpop.permute.xlu0 %1607
    %1609 = vrot.lane.b32.xlu0 %v1555, 16
    %v1610 = vpop.permute.xlu0 %1609
    %1611 = vrot.lane.b32.xlu0 %v1559, 16
    %v1612 = vpop.permute.xlu0 %1611
    %1613 = vrot.lane.b32.xlu0 %v1556, 16
    %v1614 = vpop.permute.xlu0 %1613
    %1615 = vrot.lane.b32.xlu0 %v1560, 16
    %v1616 = vpop.permute.xlu0 %1615
    %v1617 = vsel %vm165, %v1610, %v1614
    %v1618 = vsel %vm165, %v1612, %v1616
    %v1619 = vsel %vm165, %v1606, %v1610
    %v1620 = vsel %vm165, %v1608, %v1612
    %v1621 = vsel %vm165, %v1602, %v1606
    %v1622 = vsel %vm165, %v1604, %v1608
    %v1623 = vsel %vm165, %v1614, %v1602
    %v1624 = vsel %vm165, %v1616, %v1604
    %v1625 = vsel %vm88, %v1623, 0.0
    %v1626 = vsel %vm89, %v1621, 0.0
    %v1627 = vsel %vm90, %v1619, 0.0
    %v1628 = vsel %vm91, %v1617, 0.0
    %v1629 = vsel %vm88, %v1624, 0.0
    %v1630 = vsel %vm89, %v1622, 0.0
    %v1631 = vsel %vm90, %v1620, 0.0
    %v1632 = vsel %vm91, %v1618, 0.0
    %1633 = vst [vmem:[#allocation2 + $0x40] sm:$0xff] %v1625
    %1634 = vst [vmem:[#allocation2 + $0x48] sm:$0xff] %v1626
    %1635 = vst [vmem:[#allocation2 + $0x50] sm:$0xff] %v1627
    %1636 = vst [vmem:[#allocation2 + $0x58] sm:$0xff] %v1628
    %1637 = vst [vmem:[#allocation2 + $0x60] sm:$0xff] %v1629
    %1638 = vst [vmem:[#allocation2 + $0x68] sm:$0xff] %v1630
    %1639 = vst [vmem:[#allocation2 + $0x70] sm:$0xff] %v1631
    %1640 = vst [vmem:[#allocation2 + $0x78] sm:$0xff] %v1632
    %1641 = vrot.lane.b32.xlu0 %v1553, 15
    %v1642 = vpop.permute.xlu0 %1641
    %1643 = vrot.lane.b32.xlu0 %v1557, 15
    %v1644 = vpop.permute.xlu0 %1643
    %1645 = vrot.lane.b32.xlu0 %v1554, 15
    %v1646 = vpop.permute.xlu0 %1645
    %1647 = vrot.lane.b32.xlu0 %v1558, 15
    %v1648 = vpop.permute.xlu0 %1647
    %1649 = vrot.lane.b32.xlu0 %v1555, 15
    %v1650 = vpop.permute.xlu0 %1649
    %1651 = vrot.lane.b32.xlu0 %v1559, 15
    %v1652 = vpop.permute.xlu0 %1651
    %1653 = vrot.lane.b32.xlu0 %v1556, 15
    %v1654 = vpop.permute.xlu0 %1653
    %1655 = vrot.lane.b32.xlu0 %v1560, 15
    %v1656 = vpop.permute.xlu0 %1655
    %v1657 = vsel %vm206, %v1650, %v1654
    %v1658 = vsel %vm206, %v1652, %v1656
    %v1659 = vsel %vm206, %v1646, %v1650
    %v1660 = vsel %vm206, %v1648, %v1652
    %v1661 = vsel %vm206, %v1642, %v1646
    %v1662 = vsel %vm206, %v1644, %v1648
    %v1663 = vsel %vm206, %v1654, %v1642
    %v1664 = vsel %vm206, %v1656, %v1644
    %v1665 = vsel %vm215, %v1663, 0.0
    %v1666 = vsel %vm216, %v1661, 0.0
    %v1667 = vsel %vm217, %v1659, 0.0
    %v1668 = vsel %vm218, %v1657, 0.0
    %v1669 = vsel %vm215, %v1664, 0.0
    %v1670 = vsel %vm216, %v1662, 0.0
    %v1671 = vsel %vm217, %v1660, 0.0
    %v1672 = vsel %vm218, %v1658, 0.0
    %1673 = vst [vmem:[#allocation2 + $0x80] sm:$0xff] %v1665
    %1674 = vst [vmem:[#allocation2 + $0x88] sm:$0xff] %v1666
    %1675 = vst [vmem:[#allocation2 + $0x90] sm:$0xff] %v1667
    %1676 = vst [vmem:[#allocation2 + $0x98] sm:$0xff] %v1668
    %1677 = vst [vmem:[#allocation2 + $0xa0] sm:$0xff] %v1669
    %1678 = vst [vmem:[#allocation2 + $0xa8] sm:$0xff] %v1670
    %1679 = vst [vmem:[#allocation2 + $0xb0] sm:$0xff] %v1671
    %1680 = vst [vmem:[#allocation2 + $0xb8] sm:$0xff] %v1672
    %1681 = vrot.lane.b32.xlu0 %v1553, 1
    %v1682 = vpop.permute.xlu0 %1681
    %1683 = vrot.lane.b32.xlu0 %v1557, 1
    %v1684 = vpop.permute.xlu0 %1683
    %1685 = vrot.lane.b32.xlu0 %v1554, 1
    %v1686 = vpop.permute.xlu0 %1685
    %1687 = vrot.lane.b32.xlu0 %v1558, 1
    %v1688 = vpop.permute.xlu0 %1687
    %1689 = vrot.lane.b32.xlu0 %v1555, 1
    %v1690 = vpop.permute.xlu0 %1689
    %1691 = vrot.lane.b32.xlu0 %v1559, 1
    %v1692 = vpop.permute.xlu0 %1691
    %1693 = vrot.lane.b32.xlu0 %v1556, 1
    %v1694 = vpop.permute.xlu0 %1693
    %1695 = vrot.lane.b32.xlu0 %v1560, 1
    %v1696 = vpop.permute.xlu0 %1695
    %v1697 = vsel %vm251, %v1690, %v1694
    %v1698 = vsel %vm251, %v1692, %v1696
    %v1699 = vsel %vm251, %v1686, %v1690
    %v1700 = vsel %vm251, %v1688, %v1692
    %v1701 = vsel %vm251, %v1682, %v1686
    %v1702 = vsel %vm251, %v1684, %v1688
    %v1703 = vsel %vm251, %v1694, %v1682
    %v1704 = vsel %vm251, %v1696, %v1684
    %v1705 = vsel %vm96, %v1703, 0.0
    %v1706 = vsel %vm97, %v1701, 0.0
    %v1707 = vsel %vm98, %v1699, 0.0
    %v1708 = vsel %vm99, %v1697, 0.0
    %v1709 = vsel %vm96, %v1704, 0.0
    %v1710 = vsel %vm97, %v1702, 0.0
    %v1711 = vsel %vm98, %v1700, 0.0
    %v1712 = vsel %vm99, %v1698, 0.0
    %1713 = vst [vmem:[#allocation2 + $0xc0] sm:$0xff] %v1705
    %1714 = vst [vmem:[#allocation2 + $0xc8] sm:$0xff] %v1706
    %1715 = vst [vmem:[#allocation2 + $0xd0] sm:$0xff] %v1707
    %1716 = vst [vmem:[#allocation2 + $0xd8] sm:$0xff] %v1708
    %1717 = vst [vmem:[#allocation2 + $0xe0] sm:$0xff] %v1709
    %1718 = vst [vmem:[#allocation2 + $0xe8] sm:$0xff] %v1710
    %1719 = vst [vmem:[#allocation2 + $0xf0] sm:$0xff] %v1711
    %1720 = vst [vmem:[#allocation2 + $0xf8] sm:$0xff] %v1712
    %1721 = vst [vmem:[#allocation2 + $0x100] sm:$0xff] %v1553
    %1722 = vst [vmem:[#allocation2 + $0x108] sm:$0xff] %v1554
    %1723 = vst [vmem:[#allocation2 + $0x110] sm:$0xff] %v1555
    %1724 = vst [vmem:[#allocation2 + $0x118] sm:$0xff] %v1556
    %1725 = vst [vmem:[#allocation2 + $0x120] sm:$0xff] %v1557
    %1726 = vst [vmem:[#allocation2 + $0x128] sm:$0xff] %v1558
    %1727 = vst [vmem:[#allocation2 + $0x130] sm:$0xff] %v1559
    %1728 = vst [vmem:[#allocation2 + $0x138] sm:$0xff] %v1560
    %1729 = vrot.lane.b32.xlu0 %v1553, 127
    %v1730 = vpop.permute.xlu0 %1729
    %1731 = vrot.lane.b32.xlu0 %v1557, 127
    %v1732 = vpop.permute.xlu0 %1731
    %1733 = vrot.lane.b32.xlu0 %v1554, 127
    %v1734 = vpop.permute.xlu0 %1733
    %1735 = vrot.lane.b32.xlu0 %v1558, 127
    %v1736 = vpop.permute.xlu0 %1735
    %1737 = vrot.lane.b32.xlu0 %v1555, 127
    %v1738 = vpop.permute.xlu0 %1737
    %1739 = vrot.lane.b32.xlu0 %v1559, 127
    %v1740 = vpop.permute.xlu0 %1739
    %1741 = vrot.lane.b32.xlu0 %v1556, 127
    %v1742 = vpop.permute.xlu0 %1741
    %1743 = vrot.lane.b32.xlu0 %v1560, 127
    %v1744 = vpop.permute.xlu0 %1743
    %v1745 = vsel %vm300, %v1738, %v1742
    %v1746 = vsel %vm300, %v1740, %v1744
    %v1747 = vsel %vm300, %v1734, %v1738
    %v1748 = vsel %vm300, %v1736, %v1740
    %v1749 = vsel %vm300, %v1730, %v1734
    %v1750 = vsel %vm300, %v1732, %v1736
    %v1751 = vsel %vm300, %v1742, %v1730
    %v1752 = vsel %vm300, %v1744, %v1732
    %v1753 = vsel %vm100, %v1749, 0.0
    %v1754 = vsel %vm101, %v1747, 0.0
    %v1755 = vsel %vm102, %v1745, 0.0
    %v1756 = vsel %vm103, %v1751, 0.0
    %v1757 = vsel %vm100, %v1750, 0.0
    %v1758 = vsel %vm101, %v1748, 0.0
    %v1759 = vsel %vm102, %v1746, 0.0
    %v1760 = vsel %vm103, %v1752, 0.0
    %1761 = vst [vmem:[#allocation2 + $0x140] sm:$0xff] %v1753
    %1762 = vst [vmem:[#allocation2 + $0x148] sm:$0xff] %v1754
    %1763 = vst [vmem:[#allocation2 + $0x150] sm:$0xff] %v1755
    %1764 = vst [vmem:[#allocation2 + $0x158] sm:$0xff] %v1756
    %1765 = vst [vmem:[#allocation2 + $0x160] sm:$0xff] %v1757
    %1766 = vst [vmem:[#allocation2 + $0x168] sm:$0xff] %v1758
    %1767 = vst [vmem:[#allocation2 + $0x170] sm:$0xff] %v1759
    %1768 = vst [vmem:[#allocation2 + $0x178] sm:$0xff] %v1760
    %1769 = vrot.lane.b32.xlu0 %v1553, 113
    %v1770 = vpop.permute.xlu0 %1769
    %1771 = vrot.lane.b32.xlu0 %v1557, 113
    %v1772 = vpop.permute.xlu0 %1771
    %1773 = vrot.lane.b32.xlu0 %v1554, 113
    %v1774 = vpop.permute.xlu0 %1773
    %1775 = vrot.lane.b32.xlu0 %v1558, 113
    %v1776 = vpop.permute.xlu0 %1775
    %1777 = vrot.lane.b32.xlu0 %v1555, 113
    %v1778 = vpop.permute.xlu0 %1777
    %1779 = vrot.lane.b32.xlu0 %v1559, 113
    %v1780 = vpop.permute.xlu0 %1779
    %1781 = vrot.lane.b32.xlu0 %v1556, 113
    %v1782 = vpop.permute.xlu0 %1781
    %1783 = vrot.lane.b32.xlu0 %v1560, 113
    %v1784 = vpop.permute.xlu0 %1783
    %v1785 = vsel %vm341, %v1778, %v1782
    %v1786 = vsel %vm341, %v1780, %v1784
    %v1787 = vsel %vm341, %v1774, %v1778
    %v1788 = vsel %vm341, %v1776, %v1780
    %v1789 = vsel %vm341, %v1770, %v1774
    %v1790 = vsel %vm341, %v1772, %v1776
    %v1791 = vsel %vm341, %v1782, %v1770
    %v1792 = vsel %vm341, %v1784, %v1772
    %v1793 = vsel %vm350, %v1789, 0.0
    %v1794 = vsel %vm351, %v1787, 0.0
    %v1795 = vsel %vm352, %v1785, 0.0
    %v1796 = vsel %vm353, %v1791, 0.0
    %v1797 = vsel %vm350, %v1790, 0.0
    %v1798 = vsel %vm351, %v1788, 0.0
    %v1799 = vsel %vm352, %v1786, 0.0
    %v1800 = vsel %vm353, %v1792, 0.0
    %1801 = vst [vmem:[#allocation2 + $0x180] sm:$0xff] %v1793
    %1802 = vst [vmem:[#allocation2 + $0x188] sm:$0xff] %v1794
    %1803 = vst [vmem:[#allocation2 + $0x190] sm:$0xff] %v1795
    %1804 = vst [vmem:[#allocation2 + $0x198] sm:$0xff] %v1796
    %1805 = vst [vmem:[#allocation2 + $0x1a0] sm:$0xff] %v1797
    %1806 = vst [vmem:[#allocation2 + $0x1a8] sm:$0xff] %v1798
    %1807 = vst [vmem:[#allocation2 + $0x1b0] sm:$0xff] %v1799
    %1808 = vst [vmem:[#allocation2 + $0x1b8] sm:$0xff] %v1800
    %1809 = vrot.lane.b32.xlu0 %v1553, 112
    %v1810 = vpop.permute.xlu0 %1809
    %1811 = vrot.lane.b32.xlu0 %v1557, 112
    %v1812 = vpop.permute.xlu0 %1811
    %1813 = vrot.lane.b32.xlu0 %v1554, 112
    %v1814 = vpop.permute.xlu0 %1813
    %1815 = vrot.lane.b32.xlu0 %v1558, 112
    %v1816 = vpop.permute.xlu0 %1815
    %1817 = vrot.lane.b32.xlu0 %v1555, 112
    %v1818 = vpop.permute.xlu0 %1817
    %1819 = vrot.lane.b32.xlu0 %v1559, 112
    %v1820 = vpop.permute.xlu0 %1819
    %1821 = vrot.lane.b32.xlu0 %v1556, 112
    %v1822 = vpop.permute.xlu0 %1821
    %1823 = vrot.lane.b32.xlu0 %v1560, 112
    %v1824 = vpop.permute.xlu0 %1823
    %v1825 = vsel %vm386, %v1818, %v1822
    %v1826 = vsel %vm386, %v1820, %v1824
    %v1827 = vsel %vm386, %v1814, %v1818
    %v1828 = vsel %vm386, %v1816, %v1820
    %v1829 = vsel %vm386, %v1810, %v1814
    %v1830 = vsel %vm386, %v1812, %v1816
    %v1831 = vsel %vm386, %v1822, %v1810
    %v1832 = vsel %vm386, %v1824, %v1812
    %v1833 = vsel %vm92, %v1829, 0.0
    %v1834 = vsel %vm93, %v1827, 0.0
    %v1835 = vsel %vm94, %v1825, 0.0
    %v1836 = vsel %vm95, %v1831, 0.0
    %v1837 = vsel %vm92, %v1830, 0.0
    %v1838 = vsel %vm93, %v1828, 0.0
    %v1839 = vsel %vm94, %v1826, 0.0
    %v1840 = vsel %vm95, %v1832, 0.0
    %1841 = vst [vmem:[#allocation2 + $0x1c0] sm:$0xff] %v1833
    %1842 = vst [vmem:[#allocation2 + $0x1c8] sm:$0xff] %v1834
    %1843 = vst [vmem:[#allocation2 + $0x1d0] sm:$0xff] %v1835
    %1844 = vst [vmem:[#allocation2 + $0x1d8] sm:$0xff] %v1836
    %1845 = vst [vmem:[#allocation2 + $0x1e0] sm:$0xff] %v1837
    %1846 = vst [vmem:[#allocation2 + $0x1e8] sm:$0xff] %v1838
    %1847 = vst [vmem:[#allocation2 + $0x1f0] sm:$0xff] %v1839
    %1848 = vst [vmem:[#allocation2 + $0x1f8] sm:$0xff] %v1840
    %v1849 = vld [vmem:[#allocation2] sm:$0xff]
    %v1850 = vld [vmem:[#allocation2 + $0x8] sm:$0xff]
    %v1851 = vld [vmem:[#allocation2 + $0x10] sm:$0xff]
    %v1852 = vld [vmem:[#allocation2 + $0x18] sm:$0xff]
    %v1853 = vld [vmem:[#allocation2 + $0x20] sm:$0xff]
    %v1854 = vld [vmem:[#allocation2 + $0x28] sm:$0xff]
    %v1855 = vld [vmem:[#allocation2 + $0x30] sm:$0xff]
    %v1856 = vld [vmem:[#allocation2 + $0x38] sm:$0xff]
    %v1857 = vld [vmem:[#allocation2 + $0x40] sm:$0xff]
    %v1858 = vld [vmem:[#allocation2 + $0x48] sm:$0xff]
    %v1859 = vld [vmem:[#allocation2 + $0x50] sm:$0xff]
    %v1860 = vld [vmem:[#allocation2 + $0x58] sm:$0xff]
    %v1861 = vld [vmem:[#allocation2 + $0x60] sm:$0xff]
    %v1862 = vld [vmem:[#allocation2 + $0x68] sm:$0xff]
    %v1863 = vld [vmem:[#allocation2 + $0x70] sm:$0xff]
    %v1864 = vld [vmem:[#allocation2 + $0x78] sm:$0xff]
    %v1865 = vld [vmem:[#allocation2 + $0x80] sm:$0xff]
    %v1866 = vld [vmem:[#allocation2 + $0x88] sm:$0xff]
    %v1867 = vld [vmem:[#allocation2 + $0x90] sm:$0xff]
    %v1868 = vld [vmem:[#allocation2 + $0x98] sm:$0xff]
    %v1869 = vld [vmem:[#allocation2 + $0xa0] sm:$0xff]
    %v1870 = vld [vmem:[#allocation2 + $0xa8] sm:$0xff]
    %v1871 = vld [vmem:[#allocation2 + $0xb0] sm:$0xff]
    %v1872 = vld [vmem:[#allocation2 + $0xb8] sm:$0xff]
    %v1873 = vld [vmem:[#allocation2 + $0xc0] sm:$0xff]
    %v1874 = vld [vmem:[#allocation2 + $0xc8] sm:$0xff]
    %v1875 = vld [vmem:[#allocation2 + $0xd0] sm:$0xff]
    %v1876 = vld [vmem:[#allocation2 + $0xd8] sm:$0xff]
    %v1877 = vld [vmem:[#allocation2 + $0xe0] sm:$0xff]
    %v1878 = vld [vmem:[#allocation2 + $0xe8] sm:$0xff]
    %v1879 = vld [vmem:[#allocation2 + $0xf0] sm:$0xff]
    %v1880 = vld [vmem:[#allocation2 + $0xf8] sm:$0xff]
    %v1881 = vld [vmem:[#allocation2 + $0x100] sm:$0xff]
    %v1882 = vld [vmem:[#allocation2 + $0x108] sm:$0xff]
    %v1883 = vld [vmem:[#allocation2 + $0x110] sm:$0xff]
    %v1884 = vld [vmem:[#allocation2 + $0x118] sm:$0xff]
    %v1885 = vld [vmem:[#allocation2 + $0x120] sm:$0xff]
    %v1886 = vld [vmem:[#allocation2 + $0x128] sm:$0xff]
    %v1887 = vld [vmem:[#allocation2 + $0x130] sm:$0xff]
    %v1888 = vld [vmem:[#allocation2 + $0x138] sm:$0xff]
    %v1889 = vld [vmem:[#allocation2 + $0x140] sm:$0xff]
    %v1890 = vld [vmem:[#allocation2 + $0x148] sm:$0xff]
    %v1891 = vld [vmem:[#allocation2 + $0x150] sm:$0xff]
    %v1892 = vld [vmem:[#allocation2 + $0x158] sm:$0xff]
    %v1893 = vld [vmem:[#allocation2 + $0x160] sm:$0xff]
    %v1894 = vld [vmem:[#allocation2 + $0x168] sm:$0xff]
    %v1895 = vld [vmem:[#allocation2 + $0x170] sm:$0xff]
    %v1896 = vld [vmem:[#allocation2 + $0x178] sm:$0xff]
    %v1897 = vld [vmem:[#allocation2 + $0x180] sm:$0xff]
    %v1898 = vld [vmem:[#allocation2 + $0x188] sm:$0xff]
    %v1899 = vld [vmem:[#allocation2 + $0x190] sm:$0xff]
    %v1900 = vld [vmem:[#allocation2 + $0x198] sm:$0xff]
    %v1901 = vld [vmem:[#allocation2 + $0x1a0] sm:$0xff]
    %v1902 = vld [vmem:[#allocation2 + $0x1a8] sm:$0xff]
    %v1903 = vld [vmem:[#allocation2 + $0x1b0] sm:$0xff]
    %v1904 = vld [vmem:[#allocation2 + $0x1b8] sm:$0xff]
    %v1905 = vld [vmem:[#allocation2 + $0x1c0] sm:$0xff]
    %v1906 = vld [vmem:[#allocation2 + $0x1c8] sm:$0xff]
    %v1907 = vld [vmem:[#allocation2 + $0x1d0] sm:$0xff]
    %v1908 = vld [vmem:[#allocation2 + $0x1d8] sm:$0xff]
    %v1909 = vld [vmem:[#allocation2 + $0x1e0] sm:$0xff]
    %v1910 = vld [vmem:[#allocation2 + $0x1e8] sm:$0xff]
    %v1911 = vld [vmem:[#allocation2 + $0x1f0] sm:$0xff]
    %v1912 = vld [vmem:[#allocation2 + $0x1f8] sm:$0xff]
    %1913 = vrot.lane.b32.xlu0 %v1553, 111
    %v1914 = vpop.permute.xlu0 %1913
    %1915 = vrot.lane.b32.xlu0 %v1557, 111
    %v1916 = vpop.permute.xlu0 %1915
    %1917 = vrot.lane.b32.xlu0 %v1554, 111
    %v1918 = vpop.permute.xlu0 %1917
    %1919 = vrot.lane.b32.xlu0 %v1558, 111
    %v1920 = vpop.permute.xlu0 %1919
    %1921 = vrot.lane.b32.xlu0 %v1555, 111
    %v1922 = vpop.permute.xlu0 %1921
    %1923 = vrot.lane.b32.xlu0 %v1559, 111
    %v1924 = vpop.permute.xlu0 %1923
    %1925 = vrot.lane.b32.xlu0 %v1556, 111
    %v1926 = vpop.permute.xlu0 %1925
    %1927 = vrot.lane.b32.xlu0 %v1560, 111
    %v1928 = vpop.permute.xlu0 %1927
    %v1929 = vsel %vm491, %v1922, %v1926
    %v1930 = vsel %vm491, %v1924, %v1928
    %v1931 = vsel %vm491, %v1918, %v1922
    %v1932 = vsel %vm491, %v1920, %v1924
    %v1933 = vsel %vm491, %v1914, %v1918
    %v1934 = vsel %vm491, %v1916, %v1920
    %v1935 = vsel %vm491, %v1926, %v1914
    %v1936 = vsel %vm491, %v1928, %v1916
    %v1937 = vsel %vm500, %v1933, 0.0
    %v1938 = vsel %vm501, %v1931, 0.0
    %v1939 = vsel %vm502, %v1929, 0.0
    %v1940 = vsel %vm503, %v1935, 0.0
    %v1941 = vsel %vm500, %v1934, 0.0
    %v1942 = vsel %vm501, %v1932, 0.0
    %v1943 = vsel %vm502, %v1930, 0.0
    %v1944 = vsel %vm503, %v1936, 0.0
    %v1946 = vsel %vm512, %v73, 0
    %v1949 = vsel %vm512, %v74, 0
    %1951 = vmatprep.subr.mxu0 %v1938
    %1952 = vmatpush1.msra.mxu0 %v1937
    %1953 = vmatprep.subr.mxu0 %v1942
    %1954 = vmatpush1.msra.mxu0 %v1941
    %1955 = vmatprep.subr.mxu0 0.0
    %1956 = vmatpush1.msra.mxu0 0.0
    %1957 = vmatprep.subr.mxu0 0.0
    %1958 = vmatpush1.msra.mxu0 0.0
    %1959 = vmatprep.subr.mxu0 0.0
    %1960 = vmatpush1.msra.mxu0 0.0
    %1961 = vmatprep.subr.mxu0 0.0
    %1962 = vmatpush1.msra.mxu0 0.0
    %1963 = vmatprep.subr.mxu0 0.0
    %1964 = vmatpush1.msra.mxu0 0.0
    %1965 = vmatprep.subr.mxu0 0.0
    %1966 = vmatpush1.msra.mxu0 0.0
    %1967 = vmatprep.subr.mxu0 0.0
    %1968 = vmatpush1.msra.mxu0 0.0
    %1969 = vmatprep.subr.mxu0 0.0
    %1970 = vmatpush1.msra.mxu0 0.0
    %1971 = vmatprep.subr.mxu0 0.0
    %1972 = vmatpush1.msra.mxu0 0.0
    %1973 = vmatprep.subr.mxu0 0.0
    %1974 = vmatpush1.msra.mxu0 0.0
    %1975 = vmatprep.subr.mxu0 0.0
    %1976 = vmatpush1.msra.mxu0 0.0
    %1977 = vmatprep.subr.mxu0 0.0
    %1978 = vmatpush1.msra.mxu0 0.0
    %1979 = vmatprep.subr.mxu0 0.0
    %1980 = vmatpush1.msra.mxu0 0.0
    %1981 = vmatprep.subr.mxu0 0.0
    %1982 = vmatpush1.msra.mxu0 0.0
    %1983 = vmatprep.subr.mxu0 0.0
    %1984 = vmatpush1.msra.mxu0 0.0
    %1985 = vmatprep.subr.mxu0 0.0
    %1986 = vmatpush1.msra.mxu0 0.0
    %1987 = vmatprep.subr.mxu0 0.0
    %1988 = vmatpush1.msra.mxu0 0.0
    %1989 = vmatprep.subr.mxu0 0.0
    %1990 = vmatpush1.msra.mxu0 0.0
    %1991 = vmatprep.subr.mxu0 0.0
    %1992 = vmatpush1.msra.mxu0 0.0
    %1993 = vmatprep.subr.mxu0 0.0
    %1994 = vmatpush1.msra.mxu0 0.0
    %1995 = vmatprep.subr.mxu0 0.0
    %1996 = vmatpush1.msra.mxu0 0.0
    %1997 = vmatprep.subr.mxu0 0.0
    %1998 = vmatpush1.msra.mxu0 0.0
    %1999 = vmatprep.subr.mxu0 0.0
    %2000 = vmatpush1.msra.mxu0 0.0
    %2001 = vmatprep.subr.mxu0 0.0
    %2002 = vmatpush1.msra.mxu0 0.0
    %2003 = vmatprep.subr.mxu0 0.0
    %2004 = vmatpush1.msra.mxu0 0.0
    %2005 = vmatprep.subr.mxu0 0.0
    %2006 = vmatpush1.msra.mxu0 0.0
    %2007 = vmatprep.subr.mxu0 0.0
    %2008 = vmatpush1.msra.mxu0 0.0
    %2009 = vmatprep.subr.mxu0 0.0
    %2010 = vmatpush1.msra.mxu0 0.0
    %2011 = vmatprep.subr.mxu0 0.0
    %2012 = vmatpush1.msra.mxu0 0.0
    %2013 = vmatprep.subr.mxu0 0.0
    %2014 = vmatpush1.msra.mxu0 0.0
    %2015 = vmatprep.mubr.f32.mxu0 0.0
    %2016 = vmatmul.mubr.f32.gmra.mrb[0].mxu0 %v1946
    %v2017 = vpop.f32.mrb[0].mxu0
    %v2018 = vadd.f32 0.0, %v2017
    %v2019 = vpop.f32.mrb[0].mxu0
    %v2020 = vadd.f32 0.0, %v2019
    %2021 = vmatprep.mubr.f32.mxu0 0.0
    %2022 = vmatmul.mubr.f32.gmra.mrb[0].mxu0 %v1949
    %v2023 = vpop.f32.mrb[0].mxu0
    %v2024 = vadd.f32 0.0, %v2023
    %v2025 = vpop.f32.mrb[0].mxu0
    %v2026 = vadd.f32 0.0, %v2025
    %2027 = vdwg.mxu0
    %2028 = vmatprep.subr.mxu0 %v1940
    %2029 = vmatpush1.msra.mxu0 %v1939
    %2030 = vmatprep.subr.mxu0 %v1944
    %2031 = vmatpush1.msra.mxu0 %v1943
    %2032 = vmatprep.subr.mxu0 0.0
    %2033 = vmatpush1.msra.mxu0 0.0
    %2034 = vmatprep.subr.mxu0 0.0
    %2035 = vmatpush1.msra.mxu0 0.0
    %2036 = vmatprep.subr.mxu0 0.0
    %2037 = vmatpush1.msra.mxu0 0.0
    %2038 = vmatprep.subr.mxu0 0.0
    %2039 = vmatpush1.msra.mxu0 0.0
    %2040 = vmatprep.subr.mxu0 0.0
    %2041 = vmatpush1.msra.mxu0 0.0
    %2042 = vmatprep.subr.mxu0 0.0
    %2043 = vmatpush1.msra.mxu0 0.0
    %2044 = vmatprep.subr.mxu0 0.0
    %2045 = vmatpush1.msra.mxu0 0.0
    %2046 = vmatprep.subr.mxu0 0.0
    %2047 = vmatpush1.msra.mxu0 0.0
    %2048 = vmatprep.subr.mxu0 0.0
    %2049 = vmatpush1.msra.mxu0 0.0
    %2050 = vmatprep.subr.mxu0 0.0
    %2051 = vmatpush1.msra.mxu0 0.0
    %2052 = vmatprep.subr.mxu0 0.0
    %2053 = vmatpush1.msra.mxu0 0.0
    %2054 = vmatprep.subr.mxu0 0.0
    %2055 = vmatpush1.msra.mxu0 0.0
    %2056 = vmatprep.subr.mxu0 0.0
    %2057 = vmatpush1.msra.mxu0 0.0
    %2058 = vmatprep.subr.mxu0 0.0
    %2059 = vmatpush1.msra.mxu0 0.0
    %2060 = vmatprep.subr.mxu0 0.0
    %2061 = vmatpush1.msra.mxu0 0.0
    %2062 = vmatprep.subr.mxu0 0.0
    %2063 = vmatpush1.msra.mxu0 0.0
    %2064 = vmatprep.subr.mxu0 0.0
    %2065 = vmatpush1.msra.mxu0 0.0
    %2066 = vmatprep.subr.mxu0 0.0
    %2067 = vmatpush1.msra.mxu0 0.0
    %2068 = vmatprep.subr.mxu0 0.0
    %2069 = vmatpush1.msra.mxu0 0.0
    %2070 = vmatprep.subr.mxu0 0.0
    %2071 = vmatpush1.msra.mxu0 0.0
    %2072 = vmatprep.subr.mxu0 0.0
    %2073 = vmatpush1.msra.mxu0 0.0
    %2074 = vmatprep.subr.mxu0 0.0
    %2075 = vmatpush1.msra.mxu0 0.0
    %2076 = vmatprep.subr.mxu0 0.0
    %2077 = vmatpush1.msra.mxu0 0.0
    %2078 = vmatprep.subr.mxu0 0.0
    %2079 = vmatpush1.msra.mxu0 0.0
    %2080 = vmatprep.subr.mxu0 0.0
    %2081 = vmatpush1.msra.mxu0 0.0
    %2082 = vmatprep.subr.mxu0 0.0
    %2083 = vmatpush1.msra.mxu0 0.0
    %2084 = vmatprep.subr.mxu0 0.0
    %2085 = vmatpush1.msra.mxu0 0.0
    %2086 = vmatprep.subr.mxu0 0.0
    %2087 = vmatpush1.msra.mxu0 0.0
    %2088 = vmatprep.subr.mxu0 0.0
    %2089 = vmatpush1.msra.mxu0 0.0
    %2090 = vmatprep.subr.mxu0 0.0
    %2091 = vmatpush1.msra.mxu0 0.0
    %2092 = vmatprep.mubr.f32.mxu0 0.0
    %2093 = vmatmul.mubr.f32.gmra.mrb[0].mxu0 %v1946
    %v2094 = vpop.f32.mrb[0].mxu0
    %v2095 = vadd.f32 0.0, %v2094
    %v2096 = vpop.f32.mrb[0].mxu0
    %v2097 = vadd.f32 0.0, %v2096
    %2098 = vmatprep.mubr.f32.mxu0 0.0
    %2099 = vmatmul.mubr.f32.gmra.mrb[0].mxu0 %v1949
    %v2100 = vpop.f32.mrb[0].mxu0
    %v2101 = vadd.f32 0.0, %v2100
    %v2102 = vpop.f32.mrb[0].mxu0
    %v2103 = vadd.f32 0.0, %v2102
    %2104 = vdwg.mxu0
    %2105 = vmatprep.subr.mxu0 %v1850
    %2106 = vmatpush1.msra.mxu0 %v1849
    %2107 = vmatprep.subr.mxu0 %v1854
    %2108 = vmatpush1.msra.mxu0 %v1853
    %2109 = vmatprep.subr.mxu0 %v1858
    %2110 = vmatpush1.msra.mxu0 %v1857
    %2111 = vmatprep.subr.mxu0 %v1862
    %2112 = vmatpush1.msra.mxu0 %v1861
    %2113 = vmatprep.subr.mxu0 %v1866
    %2114 = vmatpush1.msra.mxu0 %v1865
    %2115 = vmatprep.subr.mxu0 %v1870
    %2116 = vmatpush1.msra.mxu0 %v1869
    %2117 = vmatprep.subr.mxu0 %v1874
    %2118 = vmatpush1.msra.mxu0 %v1873
    %2119 = vmatprep.subr.mxu0 %v1878
    %2120 = vmatpush1.msra.mxu0 %v1877
    %2121 = vmatprep.subr.mxu0 %v1882
    %2122 = vmatpush1.msra.mxu0 %v1881
    %2123 = vmatprep.subr.mxu0 %v1886
    %2124 = vmatpush1.msra.mxu0 %v1885
    %2125 = vmatprep.subr.mxu0 %v1890
    %2126 = vmatpush1.msra.mxu0 %v1889
    %2127 = vmatprep.subr.mxu0 %v1894
    %2128 = vmatpush1.msra.mxu0 %v1893
    %2129 = vmatprep.subr.mxu0 %v1898
    %2130 = vmatpush1.msra.mxu0 %v1897
    %2131 = vmatprep.subr.mxu0 %v1902
    %2132 = vmatpush1.msra.mxu0 %v1901
    %2133 = vmatprep.subr.mxu0 %v1906
    %2134 = vmatpush1.msra.mxu0 %v1905
    %2135 = vmatprep.subr.mxu0 %v1910
    %2136 = vmatpush1.msra.mxu0 %v1909
    %2137 = vmatprep.subr.mxu0 0.0
    %2138 = vmatpush1.msra.mxu0 0.0
    %2139 = vmatprep.subr.mxu0 0.0
    %2140 = vmatpush1.msra.mxu0 0.0
    %2141 = vmatprep.subr.mxu0 0.0
    %2142 = vmatpush1.msra.mxu0 0.0
    %2143 = vmatprep.subr.mxu0 0.0
    %2144 = vmatpush1.msra.mxu0 0.0
    %2145 = vmatprep.subr.mxu0 0.0
    %2146 = vmatpush1.msra.mxu0 0.0
    %2147 = vmatprep.subr.mxu0 0.0
    %2148 = vmatpush1.msra.mxu0 0.0
    %2149 = vmatprep.subr.mxu0 0.0
    %2150 = vmatpush1.msra.mxu0 0.0
    %2151 = vmatprep.subr.mxu0 0.0
    %2152 = vmatpush1.msra.mxu0 0.0
    %2153 = vmatprep.subr.mxu0 0.0
    %2154 = vmatpush1.msra.mxu0 0.0
    %2155 = vmatprep.subr.mxu0 0.0
    %2156 = vmatpush1.msra.mxu0 0.0
    %2157 = vmatprep.subr.mxu0 0.0
    %2158 = vmatpush1.msra.mxu0 0.0
    %2159 = vmatprep.subr.mxu0 0.0
    %2160 = vmatpush1.msra.mxu0 0.0
    %2161 = vmatprep.subr.mxu0 0.0
    %2162 = vmatpush1.msra.mxu0 0.0
    %2163 = vmatprep.subr.mxu0 0.0
    %2164 = vmatpush1.msra.mxu0 0.0
    %2165 = vmatprep.subr.mxu0 0.0
    %2166 = vmatpush1.msra.mxu0 0.0
    %2167 = vmatprep.subr.mxu0 0.0
    %2168 = vmatpush1.msra.mxu0 0.0
    %2169 = vmatprep.mubr.f32.mxu0 0.0
    %2170 = vmatmul.mubr.f32.gmra.mrb[0].mxu0 %v71
    %v2171 = vpop.f32.mrb[0].mxu0
    %v2172 = vadd.f32 %v2018, %v2171
    %v2173 = vpop.f32.mrb[0].mxu0
    %v2174 = vadd.f32 %v2020, %v2173
    %2175 = vmatprep.mubr.f32.mxu0 0.0
    %2176 = vmatmul.mubr.f32.gmra.mrb[0].mxu0 %v72
    %v2177 = vpop.f32.mrb[0].mxu0
    %v2178 = vadd.f32 %v2024, %v2177
    %v2179 = vpop.f32.mrb[0].mxu0
    %v2180 = vadd.f32 %v2026, %v2179
    %2181 = vdwg.mxu0
    %2182 = vmatprep.subr.mxu0 %v1852
    %2183 = vmatpush1.msra.mxu0 %v1851
    %2184 = vmatprep.subr.mxu0 %v1856
    %2185 = vmatpush1.msra.mxu0 %v1855
    %2186 = vmatprep.subr.mxu0 %v1860
    %2187 = vmatpush1.msra.mxu0 %v1859
    %2188 = vmatprep.subr.mxu0 %v1864
    %2189 = vmatpush1.msra.mxu0 %v1863
    %2190 = vmatprep.subr.mxu0 %v1868
    %2191 = vmatpush1.msra.mxu0 %v1867
    %2192 = vmatprep.subr.mxu0 %v1872
    %2193 = vmatpush1.msra.mxu0 %v1871
    %2194 = vmatprep.subr.mxu0 %v1876
    %2195 = vmatpush1.msra.mxu0 %v1875
    %2196 = vmatprep.subr.mxu0 %v1880
    %2197 = vmatpush1.msra.mxu0 %v1879
    %2198 = vmatprep.subr.mxu0 %v1884
    %2199 = vmatpush1.msra.mxu0 %v1883
    %2200 = vmatprep.subr.mxu0 %v1888
    %2201 = vmatpush1.msra.mxu0 %v1887
    %2202 = vmatprep.subr.mxu0 %v1892
    %2203 = vmatpush1.msra.mxu0 %v1891
    %2204 = vmatprep.subr.mxu0 %v1896
    %2205 = vmatpush1.msra.mxu0 %v1895
    %2206 = vmatprep.subr.mxu0 %v1900
    %2207 = vmatpush1.msra.mxu0 %v1899
    %2208 = vmatprep.subr.mxu0 %v1904
    %2209 = vmatpush1.msra.mxu0 %v1903
    %2210 = vmatprep.subr.mxu0 %v1908
    %2211 = vmatpush1.msra.mxu0 %v1907
    %2212 = vmatprep.subr.mxu0 %v1912
    %2213 = vmatpush1.msra.mxu0 %v1911
    %2214 = vmatprep.subr.mxu0 0.0
    %2215 = vmatpush1.msra.mxu0 0.0
    %2216 = vmatprep.subr.mxu0 0.0
    %2217 = vmatpush1.msra.mxu0 0.0
    %2218 = vmatprep.subr.mxu0 0.0
    %2219 = vmatpush1.msra.mxu0 0.0
    %2220 = vmatprep.subr.mxu0 0.0
    %2221 = vmatpush1.msra.mxu0 0.0
    %2222 = vmatprep.subr.mxu0 0.0
    %2223 = vmatpush1.msra.mxu0 0.0
    %2224 = vmatprep.subr.mxu0 0.0
    %2225 = vmatpush1.msra.mxu0 0.0
    %2226 = vmatprep.subr.mxu0 0.0
    %2227 = vmatpush1.msra.mxu0 0.0
    %2228 = vmatprep.subr.mxu0 0.0
    %2229 = vmatpush1.msra.mxu0 0.0
    %2230 = vmatprep.subr.mxu0 0.0
    %2231 = vmatpush1.msra.mxu0 0.0
    %2232 = vmatprep.subr.mxu0 0.0
    %2233 = vmatpush1.msra.mxu0 0.0
    %2234 = vmatprep.subr.mxu0 0.0
    %2235 = vmatpush1.msra.mxu0 0.0
    %2236 = vmatprep.subr.mxu0 0.0
    %2237 = vmatpush1.msra.mxu0 0.0
    %2238 = vmatprep.subr.mxu0 0.0
    %2239 = vmatpush1.msra.mxu0 0.0
    %2240 = vmatprep.subr.mxu0 0.0
    %2241 = vmatpush1.msra.mxu0 0.0
    %2242 = vmatprep.subr.mxu0 0.0
    %2243 = vmatpush1.msra.mxu0 0.0
    %2244 = vmatprep.subr.mxu0 0.0
    %2245 = vmatpush1.msra.mxu0 0.0
    %2246 = vmatprep.mubr.f32.mxu0 0.0
    %2247 = vmatmul.mubr.f32.gmra.mrb[0].mxu0 %v71
    %v2248 = vpop.f32.mrb[0].mxu0
    %v2249 = vadd.f32 %v2095, %v2248
    %v2250 = vpop.f32.mrb[0].mxu0
    %v2251 = vadd.f32 %v2097, %v2250
    %2252 = vmatprep.mubr.f32.mxu0 0.0
    %2253 = vmatmul.mubr.f32.gmra.mrb[0].mxu0 %v72
    %v2254 = vpop.f32.mrb[0].mxu0
    %v2255 = vadd.f32 %v2101, %v2254
    %v2256 = vpop.f32.mrb[0].mxu0
    %v2257 = vadd.f32 %v2103, %v2256
    %2258 = vdwg.mxu0
    %2260 = vset.pattern.permute.xlu0 0
    %2261 = vperm.xlu0 %2260, %v65
    %v2262 = vpop.permute.xlu0 %2261
    %2265 = vset.pattern.permute.xlu0 0
    %2266 = vperm.xlu0 %2265, %v66
    %v2267 = vpop.permute.xlu0 %2266
    %v2269 = vadd.f32 %v2172, %v2262
    %v2270 = vadd.f32 %v2174, %v2262
    %v2271 = vadd.f32 %v2249, %v2262
    %v2272 = vadd.f32 %v2251, %v2262
    %v2273 = vadd.f32 %v2178, %v2267
    %v2274 = vadd.f32 %v2180, %v2267
    %v2275 = vadd.f32 %v2255, %v2267
    %v2276 = vadd.f32 %v2257, %v2267
    %v2277 = vmax.f32 %v2269, 0.0
    %v2278 = vmax.f32 %v2270, 0.0
    %v2279 = vmax.f32 %v2271, 0.0
    %v2280 = vmax.f32 %v2272, 0.0
    %v2281 = vmax.f32 %v2273, 0.0
    %v2282 = vmax.f32 %v2274, 0.0
    %v2283 = vmax.f32 %v2275, 0.0
    %v2284 = vmax.f32 %v2276, 0.0
    %2285 = vst [vmem:[#allocation8] sm:$0xff] %v2277
    %2286 = vst [vmem:[#allocation8 + $0x8] sm:$0xff] %v2278
    %2287 = vst [vmem:[#allocation8 + $0x10] sm:$0xff] %v2279
    %2288 = vst [vmem:[#allocation8 + $0x18] sm:$0xff] %v2280
    %2289 = vst [vmem:[#allocation8 + $0x20] sm:$0xff] %v2281
    %2290 = vst [vmem:[#allocation8 + $0x28] sm:$0xff] %v2282
    %2291 = vst [vmem:[#allocation8 + $0x30] sm:$0xff] %v2283
    %2292 = vst [vmem:[#allocation8 + $0x38] sm:$0xff] %v2284
    // Predicated region
    $region38: #{tpu_custom_call.1} parent=1 // pred_check
      _
    $region39: #{tpu_custom_call.1} parent=1 // pred_check_branch
      %2294 = sbr.rel (0) target = $region41
    $region40: #{tpu_custom_call.1} parent=1 // pred_region
      %s2296 = ssub.s32 1024, 1024
      %2297 = vsyncadd [#allocation5], %s2296
      %s2298 = sshll.u32 [#allocation8], 4
      %s2299 = int_to_ptr.vmem [resolvable:$true] %s2298
      %2304 = dma.vmem_to_hbm [thread:$0]  %s2299, 1024, %s7, [#allocation5], 512, 512, 32
    $region41: #{tpu_custom_call.1} parent=1 // pred_fallthru
      _
    // Predicated region
    $region42: #{tpu_custom_call.1} parent=1 // pred_check
      _
    $region43: #{tpu_custom_call.1} parent=1 // pred_check_branch
      %2306 = sbr.rel (0) target = $region45
    $region44: #{tpu_custom_call.1} parent=1 // pred_region
      %2307 = dma.done [#allocation5], 1024
    $region45: #{tpu_custom_call.1} parent=1 // pred_fallthru
      _
    %2308 = vsyncpa [#allocation4], 1
    %2309 = vsyncpa [#allocation7], 1
    %2310 = vsyncpa [#allocation5], 1

</llo_original>
